<compile_context>
chip_gen: v7x
topology: tpu7x:2x2x1
jax: 0.10.0
libtpu: 0.0.40
codegen_flags: <defaults>
</compile_context>

<pallas_src>
import functools

import jax
import jax.numpy as jnp
from jax.experimental import pallas as pl
from jax.experimental.pallas import tpu as pltpu

LEAKY_SLOPE = 0.01  # nn.LeakyReLU default negative_slope


def _round_up(x, m):
    return ((x + m - 1) // m) * m


def _vmem_limit_bytes():
    """~3/4 of physical VMEM per generation (v5e/v6e: 128 MiB, v7x: 64 MiB)."""
    cap = 64 * 1024 * 1024  # conservative default (v7x per-TC)
    try:
        info = pltpu.get_tpu_info()
        cap = int(getattr(info, "vmem_capacity_bytes", cap)) or cap
    except Exception:
        pass
    return max(32 * 1024 * 1024, (cap * 3) // 4)


# --------------------------------------------------------------------------
# Phase 1: x_spec = exp(-eigval * t) * sum_over_N_tiles( basis_T @ (x * deg) )
# --------------------------------------------------------------------------
def _spec_kernel(vt_ref, idx_ref, fts_ref, deg_ref, selT_ref, rowg_ref,
                 eigval_ref, time_ref, spec_ref):
    ni = pl.program_id(1)  # N-reduction axis (last / "arbitrary")

    @pl.when(ni == 0)
    def _init():
        spec_ref[...] = jnp.zeros_like(spec_ref)

    xw = fts_ref[...] * deg_ref[...]                                    # [tn, tw]

    # Lane-dense masked basis tile [Kt, tn], built on the fly:
    #   repeat along sublanes via a tiny [Kt,k]x[k,tn] matmul, then a single
    #   equality mask (row's graph id == node's graph id).
    v_rep = jnp.dot(selT_ref[...], vt_ref[...],
                    preferred_element_type=jnp.float32)                 # [Kt, tn]
    basis = jnp.where(rowg_ref[...] == idx_ref[...], v_rep, 0.0)        # [Kt, tn]

    # Plain (no-transpose) MXU contraction over the node axis; accumulate
    # directly into the resident output block.
    spec_ref[...] += jnp.dot(basis, xw, preferred_element_type=jnp.float32)

    @pl.when(ni == pl.num_programs(1) - 1)
    def _finalize():
        # time already clamped (>= 1e-8) in the wrapper.
        spec_ref[...] *= jnp.exp(-eigval_ref[...] * time_ref[...])      # [Kt, tw]


# --------------------------------------------------------------------------
# Phase 2: x_diffuse = LeakyReLU( basis @ x_diffuse_spec ), per N-tile
# --------------------------------------------------------------------------
def _recon_kernel(v_ref, idx_ref, sel_ref, colg_ref, spec_ref, out_ref):
    v_rep = jnp.dot(v_ref[...], sel_ref[...],
                    preferred_element_type=jnp.float32)                 # [tn, Kt]
    basis = jnp.where(idx_ref[...] == colg_ref[...], v_rep, 0.0)        # [tn, Kt]
    x = jnp.dot(basis, spec_ref[...], preferred_element_type=jnp.float32)
    out_ref[...] = jnp.where(x >= 0, x, LEAKY_SLOPE * x)


@functools.partial(jax.jit, static_argnames=("k", "batch_size", "tile_n"))
def diffusion_layer_spectral(node_fts, node_deg_vec, k_eig_val, k_eig_vec,
                             batch_idx, diffusion_time, *, k, batch_size,
                             tile_n=None):
    """Pallas-backed forward of Diffusion_layer with method='spectral'.

    node_fts:       [N, W] float32
    node_deg_vec:   [N, 1] float32
    k_eig_val:      [k * batch_size] float32
    k_eig_vec:      [N, k] float32
    batch_idx:      [N] int32 graph assignment (0..batch_size-1, graph-sorted)
    diffusion_time: [W] float32 learnable parameter
    k, batch_size:  static Python ints; tile_n=None -> auto-sized.
    """
    node_fts = jnp.asarray(node_fts, jnp.float32)
    node_deg_vec = jnp.asarray(node_deg_vec, jnp.float32)
    k_eig_vec = jnp.asarray(k_eig_vec, jnp.float32)
    k_eig_val = jnp.asarray(k_eig_val, jnp.float32)
    diffusion_time = jnp.asarray(diffusion_time, jnp.float32)
    batch_idx = jnp.asarray(batch_idx, jnp.int32)

    N, W = node_fts.shape
    Kt = k * batch_size

    vmem_limit = _vmem_limit_bytes()

    # W tiling for phase 1 (parallel axis, helps v7x megacore when W is wide).
    tw = 128 if (W >= 256 and W % 128 == 0) else W
    nw = W // tw

    # N tiling. In phase 1 the N-tile is the lane (last) dim of the v/idx
    # blocks, so when tiling it must be a multiple of 128; otherwise use a
    # single full tile.
    n_pad8 = _round_up(N, 8)
    if tile_n is None:
        # Dominant per-step VMEM: basis + v_rep ([Kt,tn] each), double-buffered
        # fts (tn*tw), output block (Kt*tw), plus small columns.
        bytes_per_row = 4 * (3 * Kt + 3 * tw + 2 * k + 8)
        budget = max(vmem_limit // 2 - 4 * Kt * tw, 0)
        tn = max(128, min(2048, budget // max(bytes_per_row, 1)))
        tn = (tn // 128) * 128
    else:
        tn = int(tile_n)

    if tn >= n_pad8:
        tn = n_pad8                       # single tile (lane dim == full dim)
        n_pad = n_pad8
    else:
        tn = max(128, _round_up(tn, 128))
        if tn >= n_pad8:
            tn = n_pad8
            n_pad = n_pad8
        else:
            n_pad = _round_up(N, tn)
    pad = n_pad - N
    nn = n_pad // tn

    # Padded / reoriented inputs (pad rows get batch_idx=-1 -> masked out).
    fts_p = jnp.pad(node_fts, ((0, pad), (0, 0)))                      # [n_pad, W]
    deg_p = jnp.pad(node_deg_vec, ((0, pad), (0, 0)))                  # [n_pad, 1]
    v_p = jnp.pad(k_eig_vec, ((0, pad), (0, 0)))                       # [n_pad, k]
    vt_p = v_p.T                                                       # [k, n_pad]
    idx_pad = jnp.pad(batch_idx, (0, pad), constant_values=-1)
    idx_row = idx_pad.reshape(1, n_pad)                                # phase 1
    idx_col = idx_pad.reshape(n_pad, 1)                                # phase 2

    # Constants: graph id per spectral row/col, and the k->Kt "repeat" matrix.
    rowg = (jnp.arange(Kt, dtype=jnp.int32) // k).reshape(Kt, 1)       # [Kt, 1]
    colg = rowg.reshape(1, Kt)                                         # [1, Kt]
    selT = (jnp.arange(Kt)[:, None] % k ==
            jnp.arange(k)[None, :]).astype(jnp.float32)                # [Kt, k]
    sel = selT.T                                                       # [k, Kt]

    eigval_2d = k_eig_val.reshape(Kt, 1)
    # torch.clamp(diffusion_time, min=1e-8) hoisted out of the kernel.
    time_2d = jnp.maximum(diffusion_time, 1e-8).reshape(1, W)

    # ---- Phase 1: spectral projection, accumulated across N-tiles ---------
    x_diffuse_spec = pl.pallas_call(
        _spec_kernel,
        out_shape=jax.ShapeDtypeStruct((Kt, W), jnp.float32),
        grid_spec=pltpu.PrefetchScalarGridSpec(
            num_scalar_prefetch=0,
            grid=(nw, nn),                         # N-reduction axis last
            in_specs=[
                pl.BlockSpec((k, tn), lambda wi, ni: (0, ni)),    # v^T tile
                pl.BlockSpec((1, tn), lambda wi, ni: (0, ni)),    # batch_idx row
                pl.BlockSpec((tn, tw), lambda wi, ni: (ni, wi)),  # node_fts
                pl.BlockSpec((tn, 1), lambda wi, ni: (ni, 0)),    # node_deg
                pl.BlockSpec((Kt, k), lambda wi, ni: (0, 0)),     # selT const
                pl.BlockSpec((Kt, 1), lambda wi, ni: (0, 0)),     # row graph id
                pl.BlockSpec((Kt, 1), lambda wi, ni: (0, 0)),     # eigenvalues
                pl.BlockSpec((1, tw), lambda wi, ni: (0, wi)),    # diffusion t
            ],
            out_specs=pl.BlockSpec((Kt, tw), lambda wi, ni: (0, wi)),
        ),
        compiler_params=pltpu.CompilerParams(
            dimension_semantics=("parallel", "arbitrary"),
            vmem_limit_bytes=vmem_limit),
    )(vt_p, idx_row, fts_p, deg_p, selT, rowg, eigval_2d, time_2d)

    # ---- Phase 2: back to node space + LeakyReLU, N-tiles independent -----
    out_p = pl.pallas_call(
        _recon_kernel,
        out_shape=jax.ShapeDtypeStruct((n_pad, W), jnp.float32),
        grid_spec=pltpu.PrefetchScalarGridSpec(
            num_scalar_prefetch=0,
            grid=(nn,),
            in_specs=[
                pl.BlockSpec((tn, k), lambda i: (i, 0)),          # k_eig_vec
                pl.BlockSpec((tn, 1), lambda i: (i, 0)),          # batch_idx col
                pl.BlockSpec((k, Kt), lambda i: (0, 0)),          # sel const
                pl.BlockSpec((1, Kt), lambda i: (0, 0)),          # col graph id
                pl.BlockSpec((Kt, W), lambda i: (0, 0)),          # x_diffuse_spec
            ],
            out_specs=pl.BlockSpec((tn, W), lambda i: (i, 0)),
        ),
        compiler_params=pltpu.CompilerParams(
            dimension_semantics=("parallel",),
            vmem_limit_bytes=vmem_limit),
    )(v_p, idx_col, sel, colg, x_diffuse_spec)

    return out_p[:N]


def _reference(node_fts, node_deg_vec, k_eig_val, k_eig_vec, batch_idx,
               diffusion_time, k, batch_size):
    """Pure-JAX mirror of the PyTorch forward, for verification."""
    Kt = k * batch_size
    col_graph = jnp.arange(Kt) // k
    mask = (batch_idx[:, None] == col_graph[None, :]).astype(jnp.float32)
    v = jnp.tile(k_eig_vec, (1, batch_size)) * mask
    t = jnp.maximum(diffusion_time, 1e-8)
    x_spec = v.T @ (node_fts * node_deg_vec)
    coefs = jnp.exp(-k_eig_val[:, None] * t[None, :])
    x_diffuse = v @ (coefs * x_spec)
    return jnp.where(x_diffuse >= 0, x_diffuse, LEAKY_SLOPE * x_diffuse)


if __name__ == "__main__":
    key = jax.random.PRNGKey(0)
    k = 4              # eigenvectors per graph
    width = 32         # feature width
    counts = [70, 90]  # nodes per graph (N = 160 -> padding + multi-tile path)
    N = sum(counts)
    batch_size = len(counts)

    k1, k2, k3, k4, k5 = jax.random.split(key, 5)
    node_fts = jax.random.normal(k1, (N, width), dtype=jnp.float32)
    node_deg_vec = jax.random.uniform(k2, (N, 1), dtype=jnp.float32) + 0.5
    k_eig_vec = jax.random.normal(k3, (N, k), dtype=jnp.float32)
    k_eig_val = jax.random.uniform(k4, (k * batch_size,), dtype=jnp.float32)
    batch_idx = jnp.concatenate(
        [jnp.full((n,), g, dtype=jnp.int32) for g, n in enumerate(counts)])

    # Parameter initialized to 0.0 in the module; use a small positive vector
    # here (as after training) so the exp(-lambda * t) path is exercised.
    diffusion_time = jax.random.uniform(k5, (width,), dtype=jnp.float32) * 0.5

    ref = _reference(node_fts, node_deg_vec, k_eig_val, k_eig_vec, batch_idx,
                     diffusion_time, k, batch_size)

    # tile_n=128 forces a 2-step N reduction (accumulate/finalize + padding
    # rows); tile_n=None exercises the auto-sized single-tile path.
    for tile in (128, None):
        out = diffusion_layer_spectral(
            node_fts, node_deg_vec, k_eig_val, k_eig_vec, batch_idx,
            diffusion_time, k=k, batch_size=batch_size, tile_n=tile)
        out = jax.block_until_ready(out)
        assert out.shape == (N, width)
        assert jnp.allclose(out, ref, atol=1e-4, rtol=1e-4), \
            f"mismatch vs reference (tile_n={tile})"

    print("KERNEL_OK")
</pallas_src>

<mosaic_0001>
module attributes {stable_mosaic.version = 11 : i64} {
  func.func @_spec_kernel(%arg0: i32, %arg1: i32, %arg2: memref<4x128xf32, #tpu.memory_space<vmem>>, %arg3: memref<1x128xi32, #tpu.memory_space<vmem>>, %arg4: memref<128x32xf32, #tpu.memory_space<vmem>>, %arg5: memref<128x1xf32, #tpu.memory_space<vmem>>, %arg6: memref<8x4xf32, #tpu.memory_space<vmem>>, %arg7: memref<8x1xi32, #tpu.memory_space<vmem>>, %arg8: memref<8x1xf32, #tpu.memory_space<vmem>>, %arg9: memref<1x32xf32, #tpu.memory_space<vmem>>, %arg10: memref<8x32xf32, #tpu.memory_space<vmem>>) attributes {dimension_semantics = [#tpu.dimension_semantics<parallel>, #tpu.dimension_semantics<arbitrary>], iteration_bounds = array<i64: 1, 2>, scalar_prefetch = 0 : i64, scratch_operands = 0 : i64, tpu.core_type = #tpu.core_type<tc>, window_params = [{transform_indices = @transform_0, window_bounds = array<i64: 4, 128>}, {transform_indices = @transform_1, window_bounds = array<i64: 1, 128>}, {transform_indices = @transform_2, window_bounds = array<i64: 128, 32>}, {transform_indices = @transform_3, window_bounds = array<i64: 128, 1>}, {pipeline_mode = #tpu.pipeline_mode<synchronous>, transform_indices = @transform_4, window_bounds = array<i64: 8, 4>}, {pipeline_mode = #tpu.pipeline_mode<synchronous>, transform_indices = @transform_5, window_bounds = array<i64: 8, 1>}, {pipeline_mode = #tpu.pipeline_mode<synchronous>, transform_indices = @transform_6, window_bounds = array<i64: 8, 1>}, {transform_indices = @transform_7, window_bounds = array<i64: 1, 32>}, {transform_indices = @transform_8, window_bounds = array<i64: 8, 32>}]} {
    %c0_i32 = arith.constant 0 : i32
    %0 = arith.cmpi eq, %arg1, %c0_i32 : i32
    %1 = arith.extui %0 : i1 to i32
    %c0_i32_0 = arith.constant 0 : i32
    %2 = arith.cmpi ne, %1, %c0_i32_0 : i32
    scf.if %2 {
      %cst_19 = arith.constant 0.000000e+00 : f32
      %24 = vector.broadcast %cst_19 : f32 to vector<8x32xf32>
      %c0_20 = arith.constant 0 : index
      %c0_21 = arith.constant 0 : index
      %25 = vector.load %arg10[%c0_20, %c0_21] : memref<8x32xf32, #tpu.memory_space<vmem>>, vector<8x32xf32>
      tpu.vector_store %arg10[%c0_20, %c0_21], %24 {strides = array<i32>} : memref<8x32xf32, #tpu.memory_space<vmem>>, vector<8x32xf32>,
    } else {
    }
    %c0 = arith.constant 0 : index
    %c0_1 = arith.constant 0 : index
    %3 = vector.load %arg4[%c0, %c0_1] : memref<128x32xf32, #tpu.memory_space<vmem>>, vector<128x32xf32>
    %c0_2 = arith.constant 0 : index
    %c0_3 = arith.constant 0 : index
    %4 = vector.load %arg5[%c0_2, %c0_3] : memref<128x1xf32, #tpu.memory_space<vmem>>, vector<128x1xf32>
    %5 = vector.broadcast %4 : vector<128x1xf32> to vector<128x32xf32>
    %6 = arith.mulf %3, %5 : vector<128x32xf32>
    %c0_4 = arith.constant 0 : index
    %c0_5 = arith.constant 0 : index
    %7 = vector.load %arg6[%c0_4, %c0_5] : memref<8x4xf32, #tpu.memory_space<vmem>>, vector<8x4xf32>
    %c0_6 = arith.constant 0 : index
    %c0_7 = arith.constant 0 : index
    %8 = vector.load %arg2[%c0_6, %c0_7] : memref<4x128xf32, #tpu.memory_space<vmem>>, vector<4x128xf32>
    %cst = arith.constant dense<0.000000e+00> : vector<8x128xf32>
    %9 = tpu.matmul %7, %8, %cst {dimension_numbers = #tpu.dot_dimension_numbers<[1], [0], [0], [1], [0, 0, 1, 1], [], []>} : vector<8x4xf32>, vector<4x128xf32>, vector<8x128xf32> -> vector<8x128xf32>
    %c0_8 = arith.constant 0 : index
    %c0_9 = arith.constant 0 : index
    %10 = vector.load %arg7[%c0_8, %c0_9] : memref<8x1xi32, #tpu.memory_space<vmem>>, vector<8x1xi32>
    %c0_10 = arith.constant 0 : index
    %c0_11 = arith.constant 0 : index
    %11 = vector.load %arg3[%c0_10, %c0_11] : memref<1x128xi32, #tpu.memory_space<vmem>>, vector<1x128xi32>
    %12 = vector.broadcast %10 : vector<8x1xi32> to vector<8x128xi32>
    %13 = vector.broadcast %11 : vector<1x128xi32> to vector<8x128xi32>
    %14 = arith.cmpi eq, %12, %13 : vector<8x128xi32>
    %cst_12 = arith.constant 0.000000e+00 : f32
    %15 = vector.broadcast %cst_12 : f32 to vector<8x128xf32>
    %16 = arith.select %14, %9, %15 : vector<8x128xi1>, vector<8x128xf32>
    %c0_13 = arith.constant 0 : index
    %c0_14 = arith.constant 0 : index
    %17 = vector.load %arg10[%c0_13, %c0_14] : memref<8x32xf32, #tpu.memory_space<vmem>>, vector<8x32xf32>
    %cst_15 = arith.constant dense<0.000000e+00> : vector<8x32xf32>
    %18 = tpu.matmul %16, %6, %cst_15 {dimension_numbers = #tpu.dot_dimension_numbers<[1], [0], [0], [1], [0, 0, 1, 1], [], []>} : vector<8x128xf32>, vector<128x32xf32>, vector<8x32xf32> -> vector<8x32xf32>
    %19 = arith.addf %17, %18 : vector<8x32xf32>
    %c0_16 = arith.constant 0 : index
    %c0_17 = arith.constant 0 : index
    %20 = vector.load %arg10[%c0_16, %c0_17] : memref<8x32xf32, #tpu.memory_space<vmem>>, vector<8x32xf32>
    tpu.vector_store %arg10[%c0_16, %c0_17], %19 {strides = array<i32>} : memref<8x32xf32, #tpu.memory_space<vmem>>, vector<8x32xf32>,
    %c1_i32 = arith.constant 1 : i32
    %21 = arith.cmpi eq, %arg1, %c1_i32 : i32
    %22 = arith.extui %21 : i1 to i32
    %c0_i32_18 = arith.constant 0 : i32
    %23 = arith.cmpi ne, %22, %c0_i32_18 : i32
    scf.if %23 {
      %c0_19 = arith.constant 0 : index
      %c0_20 = arith.constant 0 : index
      %24 = vector.load %arg10[%c0_19, %c0_20] : memref<8x32xf32, #tpu.memory_space<vmem>>, vector<8x32xf32>
      %c0_21 = arith.constant 0 : index
      %c0_22 = arith.constant 0 : index
      %25 = vector.load %arg8[%c0_21, %c0_22] : memref<8x1xf32, #tpu.memory_space<vmem>>, vector<8x1xf32>
      %cst_23 = arith.constant 0.000000e+00 : f32
      %26 = vector.broadcast %cst_23 : f32 to vector<8x1xf32>
      %27 = arith.subf %26, %25 : vector<8x1xf32>
      %c0_24 = arith.constant 0 : index
      %c0_25 = arith.constant 0 : index
      %28 = vector.load %arg9[%c0_24, %c0_25] : memref<1x32xf32, #tpu.memory_space<vmem>>, vector<1x32xf32>
      %29 = vector.broadcast %27 : vector<8x1xf32> to vector<8x32xf32>
      %30 = vector.broadcast %28 : vector<1x32xf32> to vector<8x32xf32>
      %31 = arith.mulf %29, %30 : vector<8x32xf32>
      %32 = math.exp %31 : vector<8x32xf32>
      %33 = arith.mulf %24, %32 : vector<8x32xf32>
      %c0_26 = arith.constant 0 : index
      %c0_27 = arith.constant 0 : index
      %34 = vector.load %arg10[%c0_26, %c0_27] : memref<8x32xf32, #tpu.memory_space<vmem>>, vector<8x32xf32>
      tpu.vector_store %arg10[%c0_26, %c0_27], %33 {strides = array<i32>} : memref<8x32xf32, #tpu.memory_space<vmem>>, vector<8x32xf32>,
    } else {
    }
    return
  }
  func.func @transform_0(%arg0: i32, %arg1: i32) -> (i32, i32) {
    %c0_i32 = arith.constant 0 : i32
    %c0_i32_0 = arith.constant 0 : i32
    return %c0_i32, %arg1 : i32, i32
  }
  func.func @transform_1(%arg0: i32, %arg1: i32) -> (i32, i32) {
    %c0_i32 = arith.constant 0 : i32
    %c0_i32_0 = arith.constant 0 : i32
    return %c0_i32, %arg1 : i32, i32
  }
  func.func @transform_2(%arg0: i32, %arg1: i32) -> (i32, i32) {
    %c0_i32 = arith.constant 0 : i32
    return %arg1, %arg0 : i32, i32
  }
  func.func @transform_3(%arg0: i32, %arg1: i32) -> (i32, i32) {
    %c0_i32 = arith.constant 0 : i32
    %c0_i32_0 = arith.constant 0 : i32
    return %arg1, %c0_i32 : i32, i32
  }
  func.func @transform_4(%arg0: i32, %arg1: i32) -> (i32, i32) {
    %c0_i32 = arith.constant 0 : i32
    %c0_i32_0 = arith.constant 0 : i32
    %c0_i32_1 = arith.constant 0 : i32
    return %c0_i32, %c0_i32_0 : i32, i32
  }
  func.func @transform_5(%arg0: i32, %arg1: i32) -> (i32, i32) {
    %c0_i32 = arith.constant 0 : i32
    %c0_i32_0 = arith.constant 0 : i32
    %c0_i32_1 = arith.constant 0 : i32
    return %c0_i32, %c0_i32_0 : i32, i32
  }
  func.func @transform_6(%arg0: i32, %arg1: i32) -> (i32, i32) {
    %c0_i32 = arith.constant 0 : i32
    %c0_i32_0 = arith.constant 0 : i32
    %c0_i32_1 = arith.constant 0 : i32
    return %c0_i32, %c0_i32_0 : i32, i32
  }
  func.func @transform_7(%arg0: i32, %arg1: i32) -> (i32, i32) {
    %c0_i32 = arith.constant 0 : i32
    %c0_i32_0 = arith.constant 0 : i32
    return %c0_i32, %arg0 : i32, i32
  }
  func.func @transform_8(%arg0: i32, %arg1: i32) -> (i32, i32) {
    %c0_i32 = arith.constant 0 : i32
    %c0_i32_0 = arith.constant 0 : i32
    return %c0_i32, %arg0 : i32, i32
  }
}

module attributes {stable_mosaic.version = 11 : i64} {
  func.func @_recon_kernel(%arg0: i32, %arg1: memref<128x4xf32, #tpu.memory_space<vmem>>, %arg2: memref<128x1xi32, #tpu.memory_space<vmem>>, %arg3: memref<4x8xf32, #tpu.memory_space<vmem>>, %arg4: memref<1x8xi32, #tpu.memory_space<vmem>>, %arg5: memref<8x32xf32, #tpu.memory_space<vmem>>, %arg6: memref<128x32xf32, #tpu.memory_space<vmem>>) attributes {dimension_semantics = [#tpu.dimension_semantics<parallel>], iteration_bounds = array<i64: 2>, scalar_prefetch = 0 : i64, scratch_operands = 0 : i64, tpu.core_type = #tpu.core_type<tc>, window_params = [{transform_indices = @transform_0, window_bounds = array<i64: 128, 4>}, {transform_indices = @transform_1, window_bounds = array<i64: 128, 1>}, {pipeline_mode = #tpu.pipeline_mode<synchronous>, transform_indices = @transform_2, window_bounds = array<i64: 4, 8>}, {pipeline_mode = #tpu.pipeline_mode<synchronous>, transform_indices = @transform_3, window_bounds = array<i64: 1, 8>}, {pipeline_mode = #tpu.pipeline_mode<synchronous>, transform_indices = @transform_4, window_bounds = array<i64: 8, 32>}, {transform_indices = @transform_5, window_bounds = array<i64: 128, 32>}]} {
    %c0 = arith.constant 0 : index
    %c0_0 = arith.constant 0 : index
    %0 = vector.load %arg1[%c0, %c0_0] : memref<128x4xf32, #tpu.memory_space<vmem>>, vector<128x4xf32>
    %c0_1 = arith.constant 0 : index
    %c0_2 = arith.constant 0 : index
    %1 = vector.load %arg3[%c0_1, %c0_2] : memref<4x8xf32, #tpu.memory_space<vmem>>, vector<4x8xf32>
    %cst = arith.constant dense<0.000000e+00> : vector<128x8xf32>
    %2 = tpu.matmul %0, %1, %cst {dimension_numbers = #tpu.dot_dimension_numbers<[1], [0], [0], [1], [0, 0, 1, 1], [], []>} : vector<128x4xf32>, vector<4x8xf32>, vector<128x8xf32> -> vector<128x8xf32>
    %c0_3 = arith.constant 0 : index
    %c0_4 = arith.constant 0 : index
    %3 = vector.load %arg2[%c0_3, %c0_4] : memref<128x1xi32, #tpu.memory_space<vmem>>, vector<128x1xi32>
    %c0_5 = arith.constant 0 : index
    %c0_6 = arith.constant 0 : index
    %4 = vector.load %arg4[%c0_5, %c0_6] : memref<1x8xi32, #tpu.memory_space<vmem>>, vector<1x8xi32>
    %5 = vector.broadcast %3 : vector<128x1xi32> to vector<128x8xi32>
    %6 = vector.broadcast %4 : vector<1x8xi32> to vector<128x8xi32>
    %7 = arith.cmpi eq, %5, %6 : vector<128x8xi32>
    %cst_7 = arith.constant 0.000000e+00 : f32
    %8 = vector.broadcast %cst_7 : f32 to vector<128x8xf32>
    %9 = arith.select %7, %2, %8 : vector<128x8xi1>, vector<128x8xf32>
    %c0_8 = arith.constant 0 : index
    %c0_9 = arith.constant 0 : index
    %10 = vector.load %arg5[%c0_8, %c0_9] : memref<8x32xf32, #tpu.memory_space<vmem>>, vector<8x32xf32>
    %cst_10 = arith.constant dense<0.000000e+00> : vector<128x32xf32>
    %11 = tpu.matmul %9, %10, %cst_10 {dimension_numbers = #tpu.dot_dimension_numbers<[1], [0], [0], [1], [0, 0, 1, 1], [], []>} : vector<128x8xf32>, vector<8x32xf32>, vector<128x32xf32> -> vector<128x32xf32>
    %cst_11 = arith.constant 0.000000e+00 : f32
    %12 = vector.broadcast %cst_11 : f32 to vector<128x32xf32>
    %13 = arith.cmpf oge, %11, %12 : vector<128x32xf32>
    %cst_12 = arith.constant 0.00999999977 : f32
    %14 = vector.broadcast %cst_12 : f32 to vector<128x32xf32>
    %15 = arith.mulf %14, %11 : vector<128x32xf32>
    %16 = arith.select %13, %11, %15 : vector<128x32xi1>, vector<128x32xf32>
    %c0_13 = arith.constant 0 : index
    %c0_14 = arith.constant 0 : index
    %17 = vector.load %arg6[%c0_13, %c0_14] : memref<128x32xf32, #tpu.memory_space<vmem>>, vector<128x32xf32>
    tpu.vector_store %arg6[%c0_13, %c0_14], %16 {strides = array<i32>} : memref<128x32xf32, #tpu.memory_space<vmem>>, vector<128x32xf32>,
    return
  }
  func.func @transform_0(%arg0: i32) -> (i32, i32) {
    %c0_i32 = arith.constant 0 : i32
    %c0_i32_0 = arith.constant 0 : i32
    return %arg0, %c0_i32 : i32, i32
  }
  func.func @transform_1(%arg0: i32) -> (i32, i32) {
    %c0_i32 = arith.constant 0 : i32
    %c0_i32_0 = arith.constant 0 : i32
    return %arg0, %c0_i32 : i32, i32
  }
  func.func @transform_2(%arg0: i32) -> (i32, i32) {
    %c0_i32 = arith.constant 0 : i32
    %c0_i32_0 = arith.constant 0 : i32
    %c0_i32_1 = arith.constant 0 : i32
    return %c0_i32, %c0_i32_0 : i32, i32
  }
  func.func @transform_3(%arg0: i32) -> (i32, i32) {
    %c0_i32 = arith.constant 0 : i32
    %c0_i32_0 = arith.constant 0 : i32
    %c0_i32_1 = arith.constant 0 : i32
    return %c0_i32, %c0_i32_0 : i32, i32
  }
  func.func @transform_4(%arg0: i32) -> (i32, i32) {
    %c0_i32 = arith.constant 0 : i32
    %c0_i32_0 = arith.constant 0 : i32
    %c0_i32_1 = arith.constant 0 : i32
    return %c0_i32, %c0_i32_0 : i32, i32
  }
  func.func @transform_5(%arg0: i32) -> (i32, i32) {
    %c0_i32 = arith.constant 0 : i32
    %c0_i32_0 = arith.constant 0 : i32
    return %arg0, %c0_i32 : i32, i32
  }
}

</mosaic_0001>

<llo_original>
// kernel: diffusion_layer_spectral.2
$region0: #{diffusion_layer_spectral.2}
  #allocation0 [shape = 'u32[]', space=smem, size = 0x4, offset = 0x4, fixed_abs, tag = 'smem constant byte address 0x4 - core index']
  #allocation1 [shape = 'u32[144,128]{1,0:T(1,128)}', space=vmem, size = 0x12000, scoped, tag = 'internal scratch']
  %s0 = inlined_call_operand.vmem [shape: f32[4,256], index: 0, kind: input, shape index: {}]
  %s1 = inlined_call_operand.vmem [shape: s32[1,256], index: 1, kind: input, shape index: {}]
  %s2 = inlined_call_operand.vmem [shape: f32[256,32], index: 2, kind: input, shape index: {}]
  %s3 = inlined_call_operand.vmem [shape: f32[256,1], index: 3, kind: input, shape index: {}]
  %s4 = inlined_call_operand.vmem [shape: f32[8,4], index: 4, kind: input, shape index: {}]
  %s5 = inlined_call_operand.vmem [shape: s32[8,1], index: 5, kind: input, shape index: {}]
  %s6 = inlined_call_operand.vmem [shape: f32[8,1], index: 6, kind: input, shape index: {}]
  %s7 = inlined_call_operand.vmem [shape: f32[1,32], index: 7, kind: input, shape index: {}]
  %s8 = inlined_call_operand.vmem [shape: f32[8,32], index: 8, kind: output, shape index: {}]
  %s9 = sld [smem:[#allocation0]]
  $region73: #{diffusion_layer_spectral.2} parent=0
    _
  %s11 = ssub.s32 1, %s9
  %s12 = scalar_select 0, %s11, %s9
  loop: start=0, step=1, limit=4
  $region2: #{diffusion_layer_spectral.2} parent=0 // loop_pre_header
    _
  $region3: #{diffusion_layer_spectral.2} parent=0 // loop_header
    %s14 = sphi 0, %s18
    %p15 = scmp.ge.s32.totalorder %s14, 4
    %s21 = sphi 0, %s33
    %s22 = sphi 0, %s29
    %s23 = sphi 0, %s21
    %s24 = sphi 0, %s22
    %s25 = sphi 0, %s23
    %s26 = sphi 0, %s24
    %s36 = sphi 0, %s38
    %s39 = sphi 0, %s36
    %s40 = sphi 0, %s39
    %s56 = sphi 0, %s40
    %s62 = sphi 0, %s64
    %s65 = sphi 0, %s62
    %s66 = sphi 0, %s65
    %s82 = sphi 0, %s66
    %s90 = sphi 0, %s92
    %s93 = sphi 0, %s90
    %s94 = sphi 0, %s93
    %s110 = sphi 0, %s94
    %s116 = sphi 0, %s118
    %s119 = sphi 0, %s116
    %s120 = sphi 0, %s119
    %s136 = sphi 0, %s120
    %s140 = sphi 0, %s140
    %s142 = sphi 0, %s140
    %s143 = sphi 0, %s142
    %s157 = sphi 0, %s143
    %s161 = sphi 0, %s161
    %s163 = sphi 0, %s161
    %s164 = sphi 0, %s163
    %s178 = sphi 0, %s164
    %s182 = sphi 0, %s182
    %s184 = sphi 0, %s182
    %s185 = sphi 0, %s184
    %s199 = sphi 0, %s185
    %s205 = sphi 0, %s207
    %s208 = sphi 0, %s205
    %s209 = sphi 0, %s208
    %s225 = sphi 0, %s209
    %s231 = sphi 0, %s233
    %s234 = sphi 0, %s231
    %s235 = sphi 0, %s234
    %s251 = sphi 0, %s235
  $region4: #{diffusion_layer_spectral.2} parent=0 // loop_header_branch
    %17 = sbr.rel (%p15) target = $region8
  $region5: #{diffusion_layer_spectral.2} parent=0 // loop_body
    %s19 = ssub.s32 %s14, 1
    %s20 = ssub.s32 %s14, 2
    %s27 = sadd.s32 1, %s22
    %p28 = scmp.ge.s32.totalorder %s27, 2
    %s29 = scalar_select %p28, 0, %s27
    %s30 = sadd.s32 1, %s21
    %s31 = scalar_select %p28, %s30, %s21
    %p32 = scmp.ge.s32.totalorder %s31, 1
    %s33 = scalar_select %p32, 0, %s31
    %s34 = ssub.s32 %s22, %s29
    %p35 = scmp.eq.s32.totalorder %s34, 0
    %s37 = sadd.s32 %s36, 1
    %s38 = scalar_select %p35, %s36, %s37
    %p41 = pneg %p35
    %p42 = scmp.eq.s32.totalorder %s14, 1
    %p43 = por %p41, %p42
    %p44 = scmp.ne.s32.totalorder %s36, %s39
    %p45 = scmp.eq.s32.totalorder %s14, 0
    %p46 = por %p44, %p45
    %p47 = scmp.ne.s32.totalorder %s36, %s39
    %p48 = scmp.eq.s32.totalorder %s19, 1
    %p49 = por %p47, %p48
    %p50 = scmp.ne.s32.totalorder %s39, %s40
    %p51 = scmp.eq.s32.totalorder %s19, 0
    %p52 = por %p50, %p51
    %p53 = scmp.ne.s32.totalorder %s39, %s40
    %p54 = scmp.eq.s32.totalorder %s20, 1
    %p55 = por %p53, %p54
    %p57 = scmp.ne.s32.totalorder %s40, %s56
    %p58 = scmp.eq.s32.totalorder %s20, 0
    %p59 = por %p57, %p58
    %s60 = ssub.s32 %s22, %s29
    %p61 = scmp.eq.s32.totalorder %s60, 0
    %s63 = sadd.s32 %s62, 1
    %s64 = scalar_select %p61, %s62, %s63
    %p67 = pneg %p61
    %p68 = scmp.eq.s32.totalorder %s14, 1
    %p69 = por %p67, %p68
    %p70 = scmp.ne.s32.totalorder %s62, %s65
    %p71 = scmp.eq.s32.totalorder %s14, 0
    %p72 = por %p70, %p71
    %p73 = scmp.ne.s32.totalorder %s62, %s65
    %p74 = scmp.eq.s32.totalorder %s19, 1
    %p75 = por %p73, %p74
    %p76 = scmp.ne.s32.totalorder %s65, %s66
    %p77 = scmp.eq.s32.totalorder %s19, 0
    %p78 = por %p76, %p77
    %p79 = scmp.ne.s32.totalorder %s65, %s66
    %p80 = scmp.eq.s32.totalorder %s20, 1
    %p81 = por %p79, %p80
    %p83 = scmp.ne.s32.totalorder %s66, %s82
    %p84 = scmp.eq.s32.totalorder %s20, 0
    %p85 = por %p83, %p84
    %s86 = ssub.s32 %s22, %s29
    %s87 = ssub.s32 %s21, %s33
    %s88 = sor.u32 %s86, %s87
    %p89 = scmp.eq.s32.totalorder %s88, 0
    %s91 = sadd.s32 %s90, 1
    %s92 = scalar_select %p89, %s90, %s91
    %p95 = pneg %p89
    %p96 = scmp.eq.s32.totalorder %s14, 1
    %p97 = por %p95, %p96
    %p98 = scmp.ne.s32.totalorder %s90, %s93
    %p99 = scmp.eq.s32.totalorder %s14, 0
    %p100 = por %p98, %p99
    %p101 = scmp.ne.s32.totalorder %s90, %s93
    %p102 = scmp.eq.s32.totalorder %s19, 1
    %p103 = por %p101, %p102
    %p104 = scmp.ne.s32.totalorder %s93, %s94
    %p105 = scmp.eq.s32.totalorder %s19, 0
    %p106 = por %p104, %p105
    %p107 = scmp.ne.s32.totalorder %s93, %s94
    %p108 = scmp.eq.s32.totalorder %s20, 1
    %p109 = por %p107, %p108
    %p111 = scmp.ne.s32.totalorder %s94, %s110
    %p112 = scmp.eq.s32.totalorder %s20, 0
    %p113 = por %p111, %p112
    %s114 = ssub.s32 %s22, %s29
    %p115 = scmp.eq.s32.totalorder %s114, 0
    %s117 = sadd.s32 %s116, 1
    %s118 = scalar_select %p115, %s116, %s117
    %p121 = pneg %p115
    %p122 = scmp.eq.s32.totalorder %s14, 1
    %p123 = por %p121, %p122
    %p124 = scmp.ne.s32.totalorder %s116, %s119
    %p125 = scmp.eq.s32.totalorder %s14, 0
    %p126 = por %p124, %p125
    %p127 = scmp.ne.s32.totalorder %s116, %s119
    %p128 = scmp.eq.s32.totalorder %s19, 1
    %p129 = por %p127, %p128
    %p130 = scmp.ne.s32.totalorder %s119, %s120
    %p131 = scmp.eq.s32.totalorder %s19, 0
    %p132 = por %p130, %p131
    %p133 = scmp.ne.s32.totalorder %s119, %s120
    %p134 = scmp.eq.s32.totalorder %s20, 1
    %p135 = por %p133, %p134
    %p137 = scmp.ne.s32.totalorder %s120, %s136
    %p138 = scmp.eq.s32.totalorder %s20, 0
    %p139 = por %p137, %p138
    %s141 = sadd.s32 %s140, 1
    %p144 = scmp.eq.s32.totalorder %s14, 1
    %p145 = scmp.ne.s32.totalorder %s140, %s142
    %p146 = scmp.eq.s32.totalorder %s14, 0
    %p147 = por %p145, %p146
    %p148 = scmp.ne.s32.totalorder %s140, %s142
    %p149 = scmp.eq.s32.totalorder %s19, 1
    %p150 = por %p148, %p149
    %p151 = scmp.ne.s32.totalorder %s142, %s143
    %p152 = scmp.eq.s32.totalorder %s19, 0
    %p153 = por %p151, %p152
    %p154 = scmp.ne.s32.totalorder %s142, %s143
    %p155 = scmp.eq.s32.totalorder %s20, 1
    %p156 = por %p154, %p155
    %p158 = scmp.ne.s32.totalorder %s143, %s157
    %p159 = scmp.eq.s32.totalorder %s20, 0
    %p160 = por %p158, %p159
    %s162 = sadd.s32 %s161, 1
    %p165 = scmp.eq.s32.totalorder %s14, 1
    %p166 = scmp.ne.s32.totalorder %s161, %s163
    %p167 = scmp.eq.s32.totalorder %s14, 0
    %p168 = por %p166, %p167
    %p169 = scmp.ne.s32.totalorder %s161, %s163
    %p170 = scmp.eq.s32.totalorder %s19, 1
    %p171 = por %p169, %p170
    %p172 = scmp.ne.s32.totalorder %s163, %s164
    %p173 = scmp.eq.s32.totalorder %s19, 0
    %p174 = por %p172, %p173
    %p175 = scmp.ne.s32.totalorder %s163, %s164
    %p176 = scmp.eq.s32.totalorder %s20, 1
    %p177 = por %p175, %p176
    %p179 = scmp.ne.s32.totalorder %s164, %s178
    %p180 = scmp.eq.s32.totalorder %s20, 0
    %p181 = por %p179, %p180
    %s183 = sadd.s32 %s182, 1
    %p186 = scmp.eq.s32.totalorder %s14, 1
    %p187 = scmp.ne.s32.totalorder %s182, %s184
    %p188 = scmp.eq.s32.totalorder %s14, 0
    %p189 = por %p187, %p188
    %p190 = scmp.ne.s32.totalorder %s182, %s184
    %p191 = scmp.eq.s32.totalorder %s19, 1
    %p192 = por %p190, %p191
    %p193 = scmp.ne.s32.totalorder %s184, %s185
    %p194 = scmp.eq.s32.totalorder %s19, 0
    %p195 = por %p193, %p194
    %p196 = scmp.ne.s32.totalorder %s184, %s185
    %p197 = scmp.eq.s32.totalorder %s20, 1
    %p198 = por %p196, %p197
    %p200 = scmp.ne.s32.totalorder %s185, %s199
    %p201 = scmp.eq.s32.totalorder %s20, 0
    %p202 = por %p200, %p201
    %s203 = ssub.s32 %s21, %s33
    %p204 = scmp.eq.s32.totalorder %s203, 0
    %s206 = sadd.s32 %s205, 1
    %s207 = scalar_select %p204, %s205, %s206
    %p210 = pneg %p204
    %p211 = scmp.eq.s32.totalorder %s14, 1
    %p212 = por %p210, %p211
    %p213 = scmp.ne.s32.totalorder %s205, %s208
    %p214 = scmp.eq.s32.totalorder %s14, 0
    %p215 = por %p213, %p214
    %p216 = scmp.ne.s32.totalorder %s205, %s208
    %p217 = scmp.eq.s32.totalorder %s19, 1
    %p218 = por %p216, %p217
    %p219 = scmp.ne.s32.totalorder %s208, %s209
    %p220 = scmp.eq.s32.totalorder %s19, 0
    %p221 = por %p219, %p220
    %p222 = scmp.ne.s32.totalorder %s208, %s209
    %p223 = scmp.eq.s32.totalorder %s20, 1
    %p224 = por %p222, %p223
    %p226 = scmp.ne.s32.totalorder %s209, %s225
    %p227 = scmp.eq.s32.totalorder %s20, 0
    %p228 = por %p226, %p227
    %s229 = ssub.s32 %s21, %s33
    %p230 = scmp.eq.s32.totalorder %s229, 0
    %s232 = sadd.s32 %s231, 1
    %s233 = scalar_select %p230, %s231, %s232
    %p236 = pneg %p230
    %p237 = scmp.eq.s32.totalorder %s14, 1
    %p238 = por %p236, %p237
    %p239 = scmp.ne.s32.totalorder %s231, %s234
    %p240 = scmp.eq.s32.totalorder %s14, 0
    %p241 = por %p239, %p240
    %p242 = scmp.ne.s32.totalorder %s231, %s234
    %p243 = scmp.eq.s32.totalorder %s19, 1
    %p244 = por %p242, %p243
    %p245 = scmp.ne.s32.totalorder %s234, %s235
    %p246 = scmp.eq.s32.totalorder %s19, 0
    %p247 = por %p245, %p246
    %p248 = scmp.ne.s32.totalorder %s234, %s235
    %p249 = scmp.eq.s32.totalorder %s20, 1
    %p250 = por %p248, %p249
    %p252 = scmp.ne.s32.totalorder %s235, %s251
    %p253 = scmp.eq.s32.totalorder %s20, 0
    %p254 = por %p252, %p253
    %p255 = scmp.le.s32.totalorder 1, %s14
    %p256 = scmp.lt.s32.totalorder %s14, 3
    %p257 = pnand %p255, %p256
    %p258 = pneg %p257
    // Predicated region
    $region9: #{diffusion_layer_spectral.2} parent=5 // pred_check
      _
    $region10: #{diffusion_layer_spectral.2} parent=5 // pred_check_branch
      %260 = sbr.rel (%p257) target = $region12
    $region11: #{diffusion_layer_spectral.2} parent=5 // pred_region
      %s261 = ssub.s32 %s14, 1
      // Predicated region
      $region13: #{diffusion_layer_spectral.2} parent=11 // pred_check
        %p262 = pneg %p153
      $region14: #{diffusion_layer_spectral.2} parent=11 // pred_check_branch
        %264 = sbr.rel (%p262) target = $region16
      $region15: #{diffusion_layer_spectral.2} parent=11 // pred_region
        _
      $region16: #{diffusion_layer_spectral.2} parent=11 // pred_fallthru
        _
      // Predicated region
      $region17: #{diffusion_layer_spectral.2} parent=11 // pred_check
        %p265 = pneg %p174
      $region18: #{diffusion_layer_spectral.2} parent=11 // pred_check_branch
        %267 = sbr.rel (%p265) target = $region20
      $region19: #{diffusion_layer_spectral.2} parent=11 // pred_region
        _
      $region20: #{diffusion_layer_spectral.2} parent=11 // pred_fallthru
        _
      // Predicated region
      $region21: #{diffusion_layer_spectral.2} parent=11 // pred_check
        %p268 = pneg %p195
      $region22: #{diffusion_layer_spectral.2} parent=11 // pred_check_branch
        %270 = sbr.rel (%p268) target = $region24
      $region23: #{diffusion_layer_spectral.2} parent=11 // pred_region
        _
      $region24: #{diffusion_layer_spectral.2} parent=11 // pred_fallthru
        _
      // Predicated region
      $region25: #{diffusion_layer_spectral.2} parent=11 // pred_check
        %p271 = pneg %p221
      $region26: #{diffusion_layer_spectral.2} parent=11 // pred_check_branch
        %273 = sbr.rel (%p271) target = $region28
      $region27: #{diffusion_layer_spectral.2} parent=11 // pred_region
        %p274 = scmp.lt.s32.totalorder %s23, 0
        %s275 = scalar_select %p274, %s23, 0
        %s276 = scalar_lea.vmem %s7, %s275
      $region28: #{diffusion_layer_spectral.2} parent=11 // pred_fallthru
        _
    $region12: #{diffusion_layer_spectral.2} parent=5 // pred_fallthru
      _
    %p277 = scmp.lt.s32.totalorder %s14, 2
    // Predicated region
    $region29: #{diffusion_layer_spectral.2} parent=5 // pred_check
      %p278 = pneg %p277
    $region30: #{diffusion_layer_spectral.2} parent=5 // pred_check_branch
      %280 = sbr.rel (%p278) target = $region32
    $region31: #{diffusion_layer_spectral.2} parent=5 // pred_region
      // Predicated region
      $region33: #{diffusion_layer_spectral.2} parent=31 // pred_check
        %p281 = pneg %p46
      $region34: #{diffusion_layer_spectral.2} parent=31 // pred_check_branch
        %283 = sbr.rel (%p281) target = $region36
      $region35: #{diffusion_layer_spectral.2} parent=31 // pred_region
        %p284 = scmp.lt.s32.totalorder %s22, 1
        %s285 = scalar_select %p284, %s22, 1
        %s286 = smul.addr %s285, 4
        %s287 = scalar_lea.vmem %s0, %s286
      $region36: #{diffusion_layer_spectral.2} parent=31 // pred_fallthru
        _
      // Predicated region
      $region37: #{diffusion_layer_spectral.2} parent=31 // pred_check
        %p288 = pneg %p72
      $region38: #{diffusion_layer_spectral.2} parent=31 // pred_check_branch
        %290 = sbr.rel (%p288) target = $region40
      $region39: #{diffusion_layer_spectral.2} parent=31 // pred_region
        %p291 = scmp.lt.s32.totalorder %s22, 1
        %s292 = scalar_select %p291, %s22, 1
        %s293 = scalar_lea.vmem %s1, %s292
      $region40: #{diffusion_layer_spectral.2} parent=31 // pred_fallthru
        _
      // Predicated region
      $region41: #{diffusion_layer_spectral.2} parent=31 // pred_check
        %p294 = pneg %p100
      $region42: #{diffusion_layer_spectral.2} parent=31 // pred_check_branch
        %296 = sbr.rel (%p294) target = $region44
      $region43: #{diffusion_layer_spectral.2} parent=31 // pred_region
        %s297 = smul.u32 16, %s22
        %p298 = scmp.lt.s32.totalorder %s297, 31
        %s299 = scalar_select %p298, %s297, 31
        %p300 = scmp.lt.s32.totalorder %s21, 0
        %s301 = scalar_select %p300, %s21, 0
        %s302 = sadd.s32 %s301, %s299
        %s303 = smul.addr %s302, 8
        %s304 = scalar_lea.vmem %s2, %s303
        %s305 = smul.u32 16, %s22
      $region44: #{diffusion_layer_spectral.2} parent=31 // pred_fallthru
        _
      // Predicated region
      $region45: #{diffusion_layer_spectral.2} parent=31 // pred_check
        %p306 = pneg %p126
      $region46: #{diffusion_layer_spectral.2} parent=31 // pred_check_branch
        %308 = sbr.rel (%p306) target = $region48
      $region47: #{diffusion_layer_spectral.2} parent=31 // pred_region
        %s309 = smul.u32 16, %s22
        %p310 = scmp.lt.s32.totalorder %s309, 31
        %s311 = scalar_select %p310, %s309, 31
        %s312 = smul.addr %s311, 8
        %s313 = scalar_lea.vmem %s3, %s312
        %s314 = smul.u32 16, %s22
      $region48: #{diffusion_layer_spectral.2} parent=31 // pred_fallthru
        _
    $region32: #{diffusion_layer_spectral.2} parent=5 // pred_fallthru
      _
    %p315 = scmp.le.s32.totalorder 1, %s14
    %p316 = scmp.lt.s32.totalorder %s14, 3
    %p317 = pnand %p315, %p316
    %p318 = pneg %p317
    // Predicated region
    $region49: #{diffusion_layer_spectral.2} parent=5 // pred_check
      _
    $region50: #{diffusion_layer_spectral.2} parent=5 // pred_check_branch
      %320 = sbr.rel (%p317) target = $region52
    $region51: #{diffusion_layer_spectral.2} parent=5 // pred_region
      %s321 = ssub.s32 %s14, 1
      %p322 = scmp.lt.s32.totalorder %s24, 1
      %s323 = scalar_select %p322, %s24, 1
      %s324 = smul.addr %s323, 4
      %s325 = scalar_lea.vmem %s0, %s324
      %p326 = pneg %p52
      %p327 = pneg %p49
      %p328 = scmp.lt.s32.totalorder %s24, 1
      %s329 = scalar_select %p328, %s24, 1
      %s330 = scalar_lea.vmem %s1, %s329
      %p331 = pneg %p78
      %p332 = pneg %p75
      %s333 = smul.u32 16, %s24
      %p334 = scmp.lt.s32.totalorder %s333, 31
      %s335 = scalar_select %p334, %s333, 31
      %p336 = scmp.lt.s32.totalorder %s23, 0
      %s337 = scalar_select %p336, %s23, 0
      %s338 = sadd.s32 %s337, %s335
      %s339 = smul.addr %s338, 8
      %s340 = scalar_lea.vmem %s2, %s339
      %p341 = pneg %p106
      %p342 = pneg %p103
      %s343 = smul.u32 16, %s24
      %p344 = scmp.lt.s32.totalorder %s343, 31
      %s345 = scalar_select %p344, %s343, 31
      %s346 = smul.addr %s345, 8
      %s347 = scalar_lea.vmem %s3, %s346
      %p348 = pneg %p132
      %p349 = pneg %p129
      %p350 = pneg %p153
      %p351 = pneg %p150
      %p352 = pneg %p174
      %p353 = pneg %p171
      %p354 = pneg %p195
      %p355 = pneg %p192
      %p356 = scmp.lt.s32.totalorder %s23, 0
      %s357 = scalar_select %p356, %s23, 0
      %s358 = scalar_lea.vmem %s7, %s357
      %p359 = pneg %p221
      %p360 = pneg %p218
      %p361 = pneg %p247
      %p362 = pneg %p244
      %p363 = scmp.lt.s32.totalorder %s23, 0
      %s364 = scalar_select %p363, %s23, 0
      %s365 = smul.addr %s364, 8
      %s366 = scalar_lea.vmem %s8, %s365
      %p367 = scmp.lt.s32.totalorder %s24, 1
      %s368 = scalar_select %p367, %s24, 1
      %s369 = smul.addr %s368, 4
      %s370 = scalar_lea.vmem %s0, %s369
      %p371 = scmp.lt.s32.totalorder %s24, 1
      %s372 = scalar_select %p371, %s24, 1
      %s373 = scalar_lea.vmem %s1, %s372
      %s374 = smul.u32 16, %s24
      %p375 = scmp.lt.s32.totalorder %s374, 31
      %s376 = scalar_select %p375, %s374, 31
      %p377 = scmp.lt.s32.totalorder %s23, 0
      %s378 = scalar_select %p377, %s23, 0
      %s379 = sadd.s32 %s378, %s376
      %s380 = smul.addr %s379, 8
      %s381 = scalar_lea.vmem %s2, %s380
      %s382 = smul.u32 16, %s24
      %s383 = smul.u32 16, %s24
      %p384 = scmp.lt.s32.totalorder %s383, 31
      %s385 = scalar_select %p384, %s383, 31
      %s386 = smul.addr %s385, 8
      %s387 = scalar_lea.vmem %s3, %s386
      %s388 = smul.u32 16, %s24
      %p389 = scmp.lt.s32.totalorder %s23, 0
      %s390 = scalar_select %p389, %s23, 0
      %s391 = scalar_lea.vmem %s7, %s390
      %p392 = scmp.lt.s32.totalorder %s23, 0
      %s393 = scalar_select %p392, %s23, 0
      %s394 = smul.addr %s393, 8
      %s395 = scalar_lea.vmem %s8, %s394
      %p396 = scmp.eq.s32.totalorder %s24, 0
      // Predicated region
      $region53: #{diffusion_layer_spectral.2} parent=51 // pred_check
        %p397 = pneg %p396
      $region54: #{diffusion_layer_spectral.2} parent=51 // pred_check_branch
        %399 = sbr.rel (%p397) target = $region56
      $region55: #{diffusion_layer_spectral.2} parent=51 // pred_region
        %vm400 = vcmask 261120
        %401 = vst.msk [vmem:[%s395] sm:$0xff] %vm400, 0.0
      $region56: #{diffusion_layer_spectral.2} parent=51 // pred_fallthru
        _
      %v402 = vld [vmem:[%s381] sm:$0xff]
      %v403 = vld [vmem:[%s381 + $0x8] sm:$0xff]
      %v404 = vld [vmem:[%s381 + $0x10] sm:$0xff]
      %v405 = vld [vmem:[%s381 + $0x18] sm:$0xff]
      %v406 = vld [vmem:[%s381 + $0x20] sm:$0xff]
      %v407 = vld [vmem:[%s381 + $0x28] sm:$0xff]
      %v408 = vld [vmem:[%s381 + $0x30] sm:$0xff]
      %v409 = vld [vmem:[%s381 + $0x38] sm:$0xff]
      %v410 = vld [vmem:[%s381 + $0x40] sm:$0xff]
      %v411 = vld [vmem:[%s381 + $0x48] sm:$0xff]
      %v412 = vld [vmem:[%s381 + $0x50] sm:$0xff]
      %v413 = vld [vmem:[%s381 + $0x58] sm:$0xff]
      %v414 = vld [vmem:[%s381 + $0x60] sm:$0xff]
      %v415 = vld [vmem:[%s381 + $0x68] sm:$0xff]
      %v416 = vld [vmem:[%s381 + $0x70] sm:$0xff]
      %v417 = vld [vmem:[%s381 + $0x78] sm:$0xff]
      %v418 = vld [vmem:[%s387] sm:$0xff]
      %v419 = vld [vmem:[%s387 + $0x8] sm:$0xff]
      %v420 = vld [vmem:[%s387 + $0x10] sm:$0xff]
      %v421 = vld [vmem:[%s387 + $0x18] sm:$0xff]
      %v422 = vld [vmem:[%s387 + $0x20] sm:$0xff]
      %v423 = vld [vmem:[%s387 + $0x28] sm:$0xff]
      %v424 = vld [vmem:[%s387 + $0x30] sm:$0xff]
      %v425 = vld [vmem:[%s387 + $0x38] sm:$0xff]
      %v426 = vld [vmem:[%s387 + $0x40] sm:$0xff]
      %v427 = vld [vmem:[%s387 + $0x48] sm:$0xff]
      %v428 = vld [vmem:[%s387 + $0x50] sm:$0xff]
      %v429 = vld [vmem:[%s387 + $0x58] sm:$0xff]
      %v430 = vld [vmem:[%s387 + $0x60] sm:$0xff]
      %v431 = vld [vmem:[%s387 + $0x68] sm:$0xff]
      %v432 = vld [vmem:[%s387 + $0x70] sm:$0xff]
      %v433 = vld [vmem:[%s387 + $0x78] sm:$0xff]
      %435 = vset.pattern.permute.xlu0 0
      %436 = vperm.xlu0 %435, %v418
      %v437 = vpop.permute.xlu0 %436
      %440 = vset.pattern.permute.xlu0 0
      %441 = vperm.xlu0 %440, %v419
      %v442 = vpop.permute.xlu0 %441
      %445 = vset.pattern.permute.xlu0 0
      %446 = vperm.xlu0 %445, %v420
      %v447 = vpop.permute.xlu0 %446
      %450 = vset.pattern.permute.xlu0 0
      %451 = vperm.xlu0 %450, %v421
      %v452 = vpop.permute.xlu0 %451
      %455 = vset.pattern.permute.xlu0 0
      %456 = vperm.xlu0 %455, %v422
      %v457 = vpop.permute.xlu0 %456
      %460 = vset.pattern.permute.xlu0 0
      %461 = vperm.xlu0 %460, %v423
      %v462 = vpop.permute.xlu0 %461
      %465 = vset.pattern.permute.xlu0 0
      %466 = vperm.xlu0 %465, %v424
      %v467 = vpop.permute.xlu0 %466
      %470 = vset.pattern.permute.xlu0 0
      %471 = vperm.xlu0 %470, %v425
      %v472 = vpop.permute.xlu0 %471
      %475 = vset.pattern.permute.xlu0 0
      %476 = vperm.xlu0 %475, %v426
      %v477 = vpop.permute.xlu0 %476
      %480 = vset.pattern.permute.xlu0 0
      %481 = vperm.xlu0 %480, %v427
      %v482 = vpop.permute.xlu0 %481
      %485 = vset.pattern.permute.xlu0 0
      %486 = vperm.xlu0 %485, %v428
      %v487 = vpop.permute.xlu0 %486
      %490 = vset.pattern.permute.xlu0 0
      %491 = vperm.xlu0 %490, %v429
      %v492 = vpop.permute.xlu0 %491
      %495 = vset.pattern.permute.xlu0 0
      %496 = vperm.xlu0 %495, %v430
      %v497 = vpop.permute.xlu0 %496
      %500 = vset.pattern.permute.xlu0 0
      %501 = vperm.xlu0 %500, %v431
      %v502 = vpop.permute.xlu0 %501
      %505 = vset.pattern.permute.xlu0 0
      %506 = vperm.xlu0 %505, %v432
      %v507 = vpop.permute.xlu0 %506
      %510 = vset.pattern.permute.xlu0 0
      %511 = vperm.xlu0 %510, %v433
      %v512 = vpop.permute.xlu0 %511
      %v514 = vmul.f32 %v402, %v437
      %v515 = vmul.f32 %v403, %v442
      %v516 = vmul.f32 %v404, %v447
      %v517 = vmul.f32 %v405, %v452
      %v518 = vmul.f32 %v406, %v457
      %v519 = vmul.f32 %v407, %v462
      %v520 = vmul.f32 %v408, %v467
      %v521 = vmul.f32 %v409, %v472
      %v522 = vmul.f32 %v410, %v477
      %v523 = vmul.f32 %v411, %v482
      %v524 = vmul.f32 %v412, %v487
      %v525 = vmul.f32 %v413, %v492
      %v526 = vmul.f32 %v414, %v497
      %v527 = vmul.f32 %v415, %v502
      %v528 = vmul.f32 %v416, %v507
      %v529 = vmul.f32 %v417, %v512
      %v530 = vld [vmem:[%s4] sm:$0xff]
      %v531 = vld [vmem:[%s370] sm:$0xf]
      %vm532 = vcmask 31744
      %v534 = vsel %vm532, %v530, 0
      %vm536 = vcmask 1043456
      %v538 = vsel %vm536, %v531, 0
      %540 = vmatprep.subr.mxu0 0.0
      %541 = vmatpush1.msra.mxu0 %v538
      %542 = vmatprep.subr.mxu0 0.0
      %543 = vmatpush1.msra.mxu0 0.0
      %544 = vmatprep.subr.mxu0 0.0
      %545 = vmatpush1.msra.mxu0 0.0
      %546 = vmatprep.subr.mxu0 0.0
      %547 = vmatpush1.msra.mxu0 0.0
      %548 = vmatprep.subr.mxu0 0.0
      %549 = vmatpush1.msra.mxu0 0.0
      %550 = vmatprep.subr.mxu0 0.0
      %551 = vmatpush1.msra.mxu0 0.0
      %552 = vmatprep.subr.mxu0 0.0
      %553 = vmatpush1.msra.mxu0 0.0
      %554 = vmatprep.subr.mxu0 0.0
      %555 = vmatpush1.msra.mxu0 0.0
      %556 = vmatprep.subr.mxu0 0.0
      %557 = vmatpush1.msra.mxu0 0.0
      %558 = vmatprep.subr.mxu0 0.0
      %559 = vmatpush1.msra.mxu0 0.0
      %560 = vmatprep.subr.mxu0 0.0
      %561 = vmatpush1.msra.mxu0 0.0
      %562 = vmatprep.subr.mxu0 0.0
      %563 = vmatpush1.msra.mxu0 0.0
      %564 = vmatprep.subr.mxu0 0.0
      %565 = vmatpush1.msra.mxu0 0.0
      %566 = vmatprep.subr.mxu0 0.0
      %567 = vmatpush1.msra.mxu0 0.0
      %568 = vmatprep.subr.mxu0 0.0
      %569 = vmatpush1.msra.mxu0 0.0
      %570 = vmatprep.subr.mxu0 0.0
      %571 = vmatpush1.msra.mxu0 0.0
      %572 = vmatprep.subr.mxu0 0.0
      %573 = vmatpush1.msra.mxu0 0.0
      %574 = vmatprep.subr.mxu0 0.0
      %575 = vmatpush1.msra.mxu0 0.0
      %576 = vmatprep.subr.mxu0 0.0
      %577 = vmatpush1.msra.mxu0 0.0
      %578 = vmatprep.subr.mxu0 0.0
      %579 = vmatpush1.msra.mxu0 0.0
      %580 = vmatprep.subr.mxu0 0.0
      %581 = vmatpush1.msra.mxu0 0.0
      %582 = vmatprep.subr.mxu0 0.0
      %583 = vmatpush1.msra.mxu0 0.0
      %584 = vmatprep.subr.mxu0 0.0
      %585 = vmatpush1.msra.mxu0 0.0
      %586 = vmatprep.subr.mxu0 0.0
      %587 = vmatpush1.msra.mxu0 0.0
      %588 = vmatprep.subr.mxu0 0.0
      %589 = vmatpush1.msra.mxu0 0.0
      %590 = vmatprep.subr.mxu0 0.0
      %591 = vmatpush1.msra.mxu0 0.0
      %592 = vmatprep.subr.mxu0 0.0
      %593 = vmatpush1.msra.mxu0 0.0
      %594 = vmatprep.subr.mxu0 0.0
      %595 = vmatpush1.msra.mxu0 0.0
      %596 = vmatprep.subr.mxu0 0.0
      %597 = vmatpush1.msra.mxu0 0.0
      %598 = vmatprep.subr.mxu0 0.0
      %599 = vmatpush1.msra.mxu0 0.0
      %600 = vmatprep.subr.mxu0 0.0
      %601 = vmatpush1.msra.mxu0 0.0
      %602 = vmatprep.subr.mxu0 0.0
      %603 = vmatpush1.msra.mxu0 0.0
      %604 = vmatprep.mubr.f32.mxu0 0.0
      %605 = vmatmul.mubr.f32.gmra.mrb[0].mxu0 %v534
      %v606 = vpop.f32.mrb[0].mxu0
      %v607 = vadd.f32 0.0, %v606
      %v608 = vpop.f32.mrb[0].mxu0
      %609 = vdwg.mxu0
      %v610 = vld [vmem:[%s5] sm:$0xff]
      %v611 = vld [vmem:[%s373] sm:$0x1]
      %612 = vset.pattern.permute.xlu0 0
      %613 = vperm.xlu0 %612, %v610
      %v614 = vpop.permute.xlu0 %613
      %v615 = vlaneseq
      %v616 = vshrl.u32 %v615, 7
      %v617 = vsub.s32 0, %v616
      %v618 = vrot.slane %v611, %v617
      %vm619 = vcmp.eq.s32.totalorder %v614, %v618
      %v620 = vsel %vm619, %v607, 0.0
      %v621 = vld [vmem:[%s395] sm:$0xff]
      %622 = vmatprep.subr.mxu0 0.0
      %623 = vmatpush1.msra.mxu0 %v514
      %624 = vmatprep.subr.mxu0 0.0
      %625 = vmatpush1.msra.mxu0 %v515
      %626 = vmatprep.subr.mxu0 0.0
      %627 = vmatpush1.msra.mxu0 %v516
      %628 = vmatprep.subr.mxu0 0.0
      %629 = vmatpush1.msra.mxu0 %v517
      %630 = vmatprep.subr.mxu0 0.0
      %631 = vmatpush1.msra.mxu0 %v518
      %632 = vmatprep.subr.mxu0 0.0
      %633 = vmatpush1.msra.mxu0 %v519
      %634 = vmatprep.subr.mxu0 0.0
      %635 = vmatpush1.msra.mxu0 %v520
      %636 = vmatprep.subr.mxu0 0.0
      %637 = vmatpush1.msra.mxu0 %v521
      %638 = vmatprep.subr.mxu0 0.0
      %639 = vmatpush1.msra.mxu0 %v522
      %640 = vmatprep.subr.mxu0 0.0
      %641 = vmatpush1.msra.mxu0 %v523
      %642 = vmatprep.subr.mxu0 0.0
      %643 = vmatpush1.msra.mxu0 %v524
      %644 = vmatprep.subr.mxu0 0.0
      %645 = vmatpush1.msra.mxu0 %v525
      %646 = vmatprep.subr.mxu0 0.0
      %647 = vmatpush1.msra.mxu0 %v526
      %648 = vmatprep.subr.mxu0 0.0
      %649 = vmatpush1.msra.mxu0 %v527
      %650 = vmatprep.subr.mxu0 0.0
      %651 = vmatpush1.msra.mxu0 %v528
      %652 = vmatprep.subr.mxu0 0.0
      %653 = vmatpush1.msra.mxu0 %v529
      %654 = vmatprep.subr.mxu0 0.0
      %655 = vmatpush1.msra.mxu0 0.0
      %656 = vmatprep.subr.mxu0 0.0
      %657 = vmatpush1.msra.mxu0 0.0
      %658 = vmatprep.subr.mxu0 0.0
      %659 = vmatpush1.msra.mxu0 0.0
      %660 = vmatprep.subr.mxu0 0.0
      %661 = vmatpush1.msra.mxu0 0.0
      %662 = vmatprep.subr.mxu0 0.0
      %663 = vmatpush1.msra.mxu0 0.0
      %664 = vmatprep.subr.mxu0 0.0
      %665 = vmatpush1.msra.mxu0 0.0
      %666 = vmatprep.subr.mxu0 0.0
      %667 = vmatpush1.msra.mxu0 0.0
      %668 = vmatprep.subr.mxu0 0.0
      %669 = vmatpush1.msra.mxu0 0.0
      %670 = vmatprep.subr.mxu0 0.0
      %671 = vmatpush1.msra.mxu0 0.0
      %672 = vmatprep.subr.mxu0 0.0
      %673 = vmatpush1.msra.mxu0 0.0
      %674 = vmatprep.subr.mxu0 0.0
      %675 = vmatpush1.msra.mxu0 0.0
      %676 = vmatprep.subr.mxu0 0.0
      %677 = vmatpush1.msra.mxu0 0.0
      %678 = vmatprep.subr.mxu0 0.0
      %679 = vmatpush1.msra.mxu0 0.0
      %680 = vmatprep.subr.mxu0 0.0
      %681 = vmatpush1.msra.mxu0 0.0
      %682 = vmatprep.subr.mxu0 0.0
      %683 = vmatpush1.msra.mxu0 0.0
      %684 = vmatprep.subr.mxu0 0.0
      %685 = vmatpush1.msra.mxu0 0.0
      %686 = vmatprep.mubr.f32.mxu0 0.0
      %687 = vmatmul.mubr.f32.gmra.mrb[0].mxu0 %v620
      %v688 = vpop.f32.mrb[0].mxu0
      %v689 = vadd.f32 0.0, %v688
      %v690 = vpop.f32.mrb[0].mxu0
      %691 = vdwg.mxu0
      %v692 = vadd.f32 %v621, %v689
      %vm693 = vcmask 261120
      %694 = vst.msk [vmem:[%s395] sm:$0xff] %vm693, %v692
      %p695 = scmp.eq.s32.totalorder %s24, 1
      // Predicated region
      $region57: #{diffusion_layer_spectral.2} parent=51 // pred_check
        %p696 = pneg %p695
      $region58: #{diffusion_layer_spectral.2} parent=51 // pred_check_branch
        %698 = sbr.rel (%p696) target = $region60
      $region59: #{diffusion_layer_spectral.2} parent=51 // pred_region
        %v699 = vld [vmem:[%s395] sm:$0xff]
        %v700 = vld [vmem:[%s6] sm:$0xff]
        %v701 = vsub.f32 0.0, %v700
        %v702 = vld [vmem:[%s391] sm:$0x1]
        %704 = vset.pattern.permute.xlu0 0
        %705 = vperm.xlu0 %704, %v701
        %v706 = vpop.permute.xlu0 %705
        %v709 = vlaneseq
        %v710 = vshrl.u32 %v709, 7
        %v711 = vsub.s32 0, %v710
        %v712 = vrot.slane %v702, %v711
        %v714 = vmul.f32 %v706, %v712
        %v715 = vmul.f32 %v714, 1.442695
        %v716 = vpow.pop %v715
        %v717 = vmul.f32 %v699, %v716
        %718 = vst.msk [vmem:[%s395] sm:$0xff] %vm693, %v717
      $region60: #{diffusion_layer_spectral.2} parent=51 // pred_fallthru
        _
      %p719 = scmp.lt.s32.totalorder %s23, 0
      %s720 = scalar_select %p719, %s23, 0
      %s721 = smul.addr %s720, 8
      %s722 = scalar_lea.vmem %s8, %s721
      // Predicated region
      $region61: #{diffusion_layer_spectral.2} parent=51 // pred_check
        %p723 = pneg %p244
      $region62: #{diffusion_layer_spectral.2} parent=51 // pred_check_branch
        %725 = sbr.rel (%p723) target = $region64
      $region63: #{diffusion_layer_spectral.2} parent=51 // pred_region
        _
      $region64: #{diffusion_layer_spectral.2} parent=51 // pred_fallthru
        _
      // Predicated region
      $region65: #{diffusion_layer_spectral.2} parent=51 // pred_check
        %p726 = pneg %p244
      $region66: #{diffusion_layer_spectral.2} parent=51 // pred_check_branch
        %728 = sbr.rel (%p726) target = $region68
      $region67: #{diffusion_layer_spectral.2} parent=51 // pred_region
        %p729 = scmp.lt.s32.totalorder %s23, 0
        %s730 = scalar_select %p729, %s23, 0
        %s731 = smul.addr %s730, 8
        %s732 = scalar_lea.vmem %s8, %s731
      $region68: #{diffusion_layer_spectral.2} parent=51 // pred_fallthru
        _
    $region52: #{diffusion_layer_spectral.2} parent=5 // pred_fallthru
      _
    %p733 = scmp.le.s32.totalorder 2, %s14
    // Predicated region
    $region69: #{diffusion_layer_spectral.2} parent=5 // pred_check
      %p734 = pneg %p733
    $region70: #{diffusion_layer_spectral.2} parent=5 // pred_check_branch
      %736 = sbr.rel (%p734) target = $region72
    $region71: #{diffusion_layer_spectral.2} parent=5 // pred_region
      %s737 = ssub.s32 %s14, 2
    $region72: #{diffusion_layer_spectral.2} parent=5 // pred_fallthru
      _
  $region6: #{diffusion_layer_spectral.2} parent=0 // loop_footer
    %s18 = sadd.s32 1, %s14
  $region7: #{diffusion_layer_spectral.2} parent=0 // loop_footer_branch
    %13 = sbr.rel target = $region3
  $region8: #{diffusion_layer_spectral.2} parent=0 // loop_exit
    _

// kernel: diffusion_layer_spectral.3
$region0: #{diffusion_layer_spectral.3}
  #allocation0 [shape = 'u32[]', space=smem, size = 0x4, offset = 0x4, fixed_abs, tag = 'smem constant byte address 0x4 - core index']
  #allocation1 [shape = 'u32[144,128]{1,0:T(1,128)}', space=vmem, size = 0x12000, scoped, tag = 'internal scratch']
  %s0 = inlined_call_operand.vmem [shape: f32[256,4], index: 0, kind: input, shape index: {}]
  %s1 = inlined_call_operand.vmem [shape: s32[256,1], index: 1, kind: input, shape index: {}]
  %s2 = inlined_call_operand.vmem [shape: f32[4,8], index: 2, kind: input, shape index: {}]
  %s3 = inlined_call_operand.vmem [shape: s32[1,8], index: 3, kind: input, shape index: {}]
  %s4 = inlined_call_operand.vmem [shape: f32[8,32], index: 4, kind: input, shape index: {}]
  %s5 = inlined_call_operand.vmem [shape: f32[256,32], index: 5, kind: output, shape index: {}]
  %s6 = sld [smem:[#allocation0]]
  $region53: #{diffusion_layer_spectral.3} parent=0
    _
  %s8 = ssub.s32 1, %s6
  %s9 = scalar_select 0, %s8, %s6
  loop: start=0, step=1, limit=4
  $region2: #{diffusion_layer_spectral.3} parent=0 // loop_pre_header
    _
  $region3: #{diffusion_layer_spectral.3} parent=0 // loop_header
    %s11 = sphi 0, %s15
    %p12 = scmp.ge.s32.totalorder %s11, 4
    %s21 = sphi 0, %s23
    %s24 = sphi 0, %s21
    %s25 = sphi 0, %s24
    %s41 = sphi 0, %s25
    %s47 = sphi 0, %s49
    %s50 = sphi 0, %s47
    %s51 = sphi 0, %s50
    %s67 = sphi 0, %s51
    %s71 = sphi 0, %s71
    %s73 = sphi 0, %s71
    %s74 = sphi 0, %s73
    %s88 = sphi 0, %s74
    %s92 = sphi 0, %s92
    %s94 = sphi 0, %s92
    %s95 = sphi 0, %s94
    %s109 = sphi 0, %s95
    %s113 = sphi 0, %s113
    %s115 = sphi 0, %s113
    %s116 = sphi 0, %s115
    %s130 = sphi 0, %s116
    %s136 = sphi 0, %s138
    %s139 = sphi 0, %s136
    %s140 = sphi 0, %s139
    %s156 = sphi 0, %s140
  $region4: #{diffusion_layer_spectral.3} parent=0 // loop_header_branch
    %14 = sbr.rel (%p12) target = $region8
  $region5: #{diffusion_layer_spectral.3} parent=0 // loop_body
    %s16 = ssub.s32 %s11, 1
    %s17 = ssub.s32 %s11, 2
    %s18 = sadd.s32 %s11, 1
    %s19 = ssub.s32 %s11, %s18
    %p20 = scmp.eq.s32.totalorder %s19, 0
    %s22 = sadd.s32 %s21, 1
    %s23 = scalar_select %p20, %s21, %s22
    %p26 = pneg %p20
    %p27 = scmp.eq.s32.totalorder %s11, 1
    %p28 = por %p26, %p27
    %p29 = scmp.ne.s32.totalorder %s21, %s24
    %p30 = scmp.eq.s32.totalorder %s11, 0
    %p31 = por %p29, %p30
    %p32 = scmp.ne.s32.totalorder %s21, %s24
    %p33 = scmp.eq.s32.totalorder %s16, 1
    %p34 = por %p32, %p33
    %p35 = scmp.ne.s32.totalorder %s24, %s25
    %p36 = scmp.eq.s32.totalorder %s16, 0
    %p37 = por %p35, %p36
    %p38 = scmp.ne.s32.totalorder %s24, %s25
    %p39 = scmp.eq.s32.totalorder %s17, 1
    %p40 = por %p38, %p39
    %p42 = scmp.ne.s32.totalorder %s25, %s41
    %p43 = scmp.eq.s32.totalorder %s17, 0
    %p44 = por %p42, %p43
    %s45 = ssub.s32 %s11, %s18
    %p46 = scmp.eq.s32.totalorder %s45, 0
    %s48 = sadd.s32 %s47, 1
    %s49 = scalar_select %p46, %s47, %s48
    %p52 = pneg %p46
    %p53 = scmp.eq.s32.totalorder %s11, 1
    %p54 = por %p52, %p53
    %p55 = scmp.ne.s32.totalorder %s47, %s50
    %p56 = scmp.eq.s32.totalorder %s11, 0
    %p57 = por %p55, %p56
    %p58 = scmp.ne.s32.totalorder %s47, %s50
    %p59 = scmp.eq.s32.totalorder %s16, 1
    %p60 = por %p58, %p59
    %p61 = scmp.ne.s32.totalorder %s50, %s51
    %p62 = scmp.eq.s32.totalorder %s16, 0
    %p63 = por %p61, %p62
    %p64 = scmp.ne.s32.totalorder %s50, %s51
    %p65 = scmp.eq.s32.totalorder %s17, 1
    %p66 = por %p64, %p65
    %p68 = scmp.ne.s32.totalorder %s51, %s67
    %p69 = scmp.eq.s32.totalorder %s17, 0
    %p70 = por %p68, %p69
    %s72 = sadd.s32 %s71, 1
    %p75 = scmp.eq.s32.totalorder %s11, 1
    %p76 = scmp.ne.s32.totalorder %s71, %s73
    %p77 = scmp.eq.s32.totalorder %s11, 0
    %p78 = por %p76, %p77
    %p79 = scmp.ne.s32.totalorder %s71, %s73
    %p80 = scmp.eq.s32.totalorder %s16, 1
    %p81 = por %p79, %p80
    %p82 = scmp.ne.s32.totalorder %s73, %s74
    %p83 = scmp.eq.s32.totalorder %s16, 0
    %p84 = por %p82, %p83
    %p85 = scmp.ne.s32.totalorder %s73, %s74
    %p86 = scmp.eq.s32.totalorder %s17, 1
    %p87 = por %p85, %p86
    %p89 = scmp.ne.s32.totalorder %s74, %s88
    %p90 = scmp.eq.s32.totalorder %s17, 0
    %p91 = por %p89, %p90
    %s93 = sadd.s32 %s92, 1
    %p96 = scmp.eq.s32.totalorder %s11, 1
    %p97 = scmp.ne.s32.totalorder %s92, %s94
    %p98 = scmp.eq.s32.totalorder %s11, 0
    %p99 = por %p97, %p98
    %p100 = scmp.ne.s32.totalorder %s92, %s94
    %p101 = scmp.eq.s32.totalorder %s16, 1
    %p102 = por %p100, %p101
    %p103 = scmp.ne.s32.totalorder %s94, %s95
    %p104 = scmp.eq.s32.totalorder %s16, 0
    %p105 = por %p103, %p104
    %p106 = scmp.ne.s32.totalorder %s94, %s95
    %p107 = scmp.eq.s32.totalorder %s17, 1
    %p108 = por %p106, %p107
    %p110 = scmp.ne.s32.totalorder %s95, %s109
    %p111 = scmp.eq.s32.totalorder %s17, 0
    %p112 = por %p110, %p111
    %s114 = sadd.s32 %s113, 1
    %p117 = scmp.eq.s32.totalorder %s11, 1
    %p118 = scmp.ne.s32.totalorder %s113, %s115
    %p119 = scmp.eq.s32.totalorder %s11, 0
    %p120 = por %p118, %p119
    %p121 = scmp.ne.s32.totalorder %s113, %s115
    %p122 = scmp.eq.s32.totalorder %s16, 1
    %p123 = por %p121, %p122
    %p124 = scmp.ne.s32.totalorder %s115, %s116
    %p125 = scmp.eq.s32.totalorder %s16, 0
    %p126 = por %p124, %p125
    %p127 = scmp.ne.s32.totalorder %s115, %s116
    %p128 = scmp.eq.s32.totalorder %s17, 1
    %p129 = por %p127, %p128
    %p131 = scmp.ne.s32.totalorder %s116, %s130
    %p132 = scmp.eq.s32.totalorder %s17, 0
    %p133 = por %p131, %p132
    %s134 = ssub.s32 %s11, %s18
    %p135 = scmp.eq.s32.totalorder %s134, 0
    %s137 = sadd.s32 %s136, 1
    %s138 = scalar_select %p135, %s136, %s137
    %p141 = pneg %p135
    %p142 = scmp.eq.s32.totalorder %s11, 1
    %p143 = por %p141, %p142
    %p144 = scmp.ne.s32.totalorder %s136, %s139
    %p145 = scmp.eq.s32.totalorder %s11, 0
    %p146 = por %p144, %p145
    %p147 = scmp.ne.s32.totalorder %s136, %s139
    %p148 = scmp.eq.s32.totalorder %s16, 1
    %p149 = por %p147, %p148
    %p150 = scmp.ne.s32.totalorder %s139, %s140
    %p151 = scmp.eq.s32.totalorder %s16, 0
    %p152 = por %p150, %p151
    %p153 = scmp.ne.s32.totalorder %s139, %s140
    %p154 = scmp.eq.s32.totalorder %s17, 1
    %p155 = por %p153, %p154
    %p157 = scmp.ne.s32.totalorder %s140, %s156
    %p158 = scmp.eq.s32.totalorder %s17, 0
    %p159 = por %p157, %p158
    %p160 = scmp.le.s32.totalorder 1, %s11
    %p161 = scmp.lt.s32.totalorder %s11, 3
    %p162 = pnand %p160, %p161
    %p163 = pneg %p162
    // Predicated region
    $region9: #{diffusion_layer_spectral.3} parent=5 // pred_check
      _
    $region10: #{diffusion_layer_spectral.3} parent=5 // pred_check_branch
      %165 = sbr.rel (%p162) target = $region12
    $region11: #{diffusion_layer_spectral.3} parent=5 // pred_region
      %s166 = ssub.s32 %s11, 1
      // Predicated region
      $region13: #{diffusion_layer_spectral.3} parent=11 // pred_check
        %p167 = pneg %p84
      $region14: #{diffusion_layer_spectral.3} parent=11 // pred_check_branch
        %169 = sbr.rel (%p167) target = $region16
      $region15: #{diffusion_layer_spectral.3} parent=11 // pred_region
        _
      $region16: #{diffusion_layer_spectral.3} parent=11 // pred_fallthru
        _
      // Predicated region
      $region17: #{diffusion_layer_spectral.3} parent=11 // pred_check
        %p170 = pneg %p105
      $region18: #{diffusion_layer_spectral.3} parent=11 // pred_check_branch
        %172 = sbr.rel (%p170) target = $region20
      $region19: #{diffusion_layer_spectral.3} parent=11 // pred_region
        _
      $region20: #{diffusion_layer_spectral.3} parent=11 // pred_fallthru
        _
      // Predicated region
      $region21: #{diffusion_layer_spectral.3} parent=11 // pred_check
        %p173 = pneg %p126
      $region22: #{diffusion_layer_spectral.3} parent=11 // pred_check_branch
        %175 = sbr.rel (%p173) target = $region24
      $region23: #{diffusion_layer_spectral.3} parent=11 // pred_region
        _
      $region24: #{diffusion_layer_spectral.3} parent=11 // pred_fallthru
        _
    $region12: #{diffusion_layer_spectral.3} parent=5 // pred_fallthru
      _
    %p176 = scmp.lt.s32.totalorder %s11, 2
    // Predicated region
    $region25: #{diffusion_layer_spectral.3} parent=5 // pred_check
      %p177 = pneg %p176
    $region26: #{diffusion_layer_spectral.3} parent=5 // pred_check_branch
      %179 = sbr.rel (%p177) target = $region28
    $region27: #{diffusion_layer_spectral.3} parent=5 // pred_region
      // Predicated region
      $region29: #{diffusion_layer_spectral.3} parent=27 // pred_check
        %p180 = pneg %p31
      $region30: #{diffusion_layer_spectral.3} parent=27 // pred_check_branch
        %182 = sbr.rel (%p180) target = $region32
      $region31: #{diffusion_layer_spectral.3} parent=27 // pred_region
        %s183 = smul.u32 16, %s11
        %p184 = scmp.lt.s32.totalorder %s183, 31
        %s185 = scalar_select %p184, %s183, 31
        %s186 = smul.addr %s185, 8
        %s187 = scalar_lea.vmem %s0, %s186
        %s188 = smul.u32 16, %s11
      $region32: #{diffusion_layer_spectral.3} parent=27 // pred_fallthru
        _
      // Predicated region
      $region33: #{diffusion_layer_spectral.3} parent=27 // pred_check
        %p189 = pneg %p57
      $region34: #{diffusion_layer_spectral.3} parent=27 // pred_check_branch
        %191 = sbr.rel (%p189) target = $region36
      $region35: #{diffusion_layer_spectral.3} parent=27 // pred_region
        %s192 = smul.u32 16, %s11
        %p193 = scmp.lt.s32.totalorder %s192, 31
        %s194 = scalar_select %p193, %s192, 31
        %s195 = smul.addr %s194, 8
        %s196 = scalar_lea.vmem %s1, %s195
        %s197 = smul.u32 16, %s11
      $region36: #{diffusion_layer_spectral.3} parent=27 // pred_fallthru
        _
    $region28: #{diffusion_layer_spectral.3} parent=5 // pred_fallthru
      _
    %p198 = scmp.le.s32.totalorder 1, %s11
    %p199 = scmp.lt.s32.totalorder %s11, 3
    %p200 = pnand %p198, %p199
    %p201 = pneg %p200
    // Predicated region
    $region37: #{diffusion_layer_spectral.3} parent=5 // pred_check
      _
    $region38: #{diffusion_layer_spectral.3} parent=5 // pred_check_branch
      %203 = sbr.rel (%p200) target = $region40
    $region39: #{diffusion_layer_spectral.3} parent=5 // pred_region
      %s204 = ssub.s32 %s11, 1
      %s205 = smul.u32 16, %s16
      %p206 = scmp.lt.s32.totalorder %s205, 31
      %s207 = scalar_select %p206, %s205, 31
      %s208 = smul.addr %s207, 8
      %s209 = scalar_lea.vmem %s0, %s208
      %p210 = pneg %p37
      %p211 = pneg %p34
      %s212 = smul.u32 16, %s16
      %p213 = scmp.lt.s32.totalorder %s212, 31
      %s214 = scalar_select %p213, %s212, 31
      %s215 = smul.addr %s214, 8
      %s216 = scalar_lea.vmem %s1, %s215
      %p217 = pneg %p63
      %p218 = pneg %p60
      %p219 = pneg %p84
      %p220 = pneg %p81
      %p221 = pneg %p105
      %p222 = pneg %p102
      %p223 = pneg %p126
      %p224 = pneg %p123
      %p225 = pneg %p152
      %p226 = pneg %p149
      %s227 = smul.u32 16, %s16
      %p228 = scmp.lt.s32.totalorder %s227, 31
      %s229 = scalar_select %p228, %s227, 31
      %s230 = smul.addr %s229, 8
      %s231 = scalar_lea.vmem %s5, %s230
      %s232 = smul.u32 16, %s16
      %p233 = scmp.lt.s32.totalorder %s232, 31
      %s234 = scalar_select %p233, %s232, 31
      %s235 = smul.addr %s234, 8
      %s236 = scalar_lea.vmem %s0, %s235
      %s237 = smul.u32 16, %s16
      %s238 = smul.u32 16, %s16
      %p239 = scmp.lt.s32.totalorder %s238, 31
      %s240 = scalar_select %p239, %s238, 31
      %s241 = smul.addr %s240, 8
      %s242 = scalar_lea.vmem %s1, %s241
      %s243 = smul.u32 16, %s16
      %s244 = smul.u32 16, %s16
      %p245 = scmp.lt.s32.totalorder %s244, 31
      %s246 = scalar_select %p245, %s244, 31
      %s247 = smul.addr %s246, 8
      %s248 = scalar_lea.vmem %s5, %s247
      %s249 = smul.u32 16, %s16
      %v250 = vld [vmem:[%s236] sm:$0xff]
      %v251 = vld [vmem:[%s236 + $0x8] sm:$0xff]
      %v252 = vld [vmem:[%s236 + $0x10] sm:$0xff]
      %v253 = vld [vmem:[%s236 + $0x18] sm:$0xff]
      %v254 = vld [vmem:[%s236 + $0x20] sm:$0xff]
      %v255 = vld [vmem:[%s236 + $0x28] sm:$0xff]
      %v256 = vld [vmem:[%s236 + $0x30] sm:$0xff]
      %v257 = vld [vmem:[%s236 + $0x38] sm:$0xff]
      %v258 = vld [vmem:[%s236 + $0x40] sm:$0xff]
      %v259 = vld [vmem:[%s236 + $0x48] sm:$0xff]
      %v260 = vld [vmem:[%s236 + $0x50] sm:$0xff]
      %v261 = vld [vmem:[%s236 + $0x58] sm:$0xff]
      %v262 = vld [vmem:[%s236 + $0x60] sm:$0xff]
      %v263 = vld [vmem:[%s236 + $0x68] sm:$0xff]
      %v264 = vld [vmem:[%s236 + $0x70] sm:$0xff]
      %v265 = vld [vmem:[%s236 + $0x78] sm:$0xff]
      %v266 = vld [vmem:[%s2] sm:$0xf]
      %vm267 = vcmask 31744
      %v269 = vsel %vm267, %v250, 0
      %v272 = vsel %vm267, %v251, 0
      %v275 = vsel %vm267, %v252, 0
      %v278 = vsel %vm267, %v253, 0
      %v281 = vsel %vm267, %v254, 0
      %v284 = vsel %vm267, %v255, 0
      %v287 = vsel %vm267, %v256, 0
      %v290 = vsel %vm267, %v257, 0
      %v293 = vsel %vm267, %v258, 0
      %v296 = vsel %vm267, %v259, 0
      %v299 = vsel %vm267, %v260, 0
      %v302 = vsel %vm267, %v261, 0
      %v305 = vsel %vm267, %v262, 0
      %v308 = vsel %vm267, %v263, 0
      %v311 = vsel %vm267, %v264, 0
      %v314 = vsel %vm267, %v265, 0
      %vm316 = vcmask 1043456
      %v318 = vsel %vm316, %v266, 0
      %320 = vmatprep.subr.mxu0 0.0
      %321 = vmatpush1.msra.mxu0 %v318
      %322 = vmatprep.subr.mxu0 0.0
      %323 = vmatpush1.msra.mxu0 0.0
      %324 = vmatprep.subr.mxu0 0.0
      %325 = vmatpush1.msra.mxu0 0.0
      %326 = vmatprep.subr.mxu0 0.0
      %327 = vmatpush1.msra.mxu0 0.0
      %328 = vmatprep.subr.mxu0 0.0
      %329 = vmatpush1.msra.mxu0 0.0
      %330 = vmatprep.subr.mxu0 0.0
      %331 = vmatpush1.msra.mxu0 0.0
      %332 = vmatprep.subr.mxu0 0.0
      %333 = vmatpush1.msra.mxu0 0.0
      %334 = vmatprep.subr.mxu0 0.0
      %335 = vmatpush1.msra.mxu0 0.0
      %336 = vmatprep.subr.mxu0 0.0
      %337 = vmatpush1.msra.mxu0 0.0
      %338 = vmatprep.subr.mxu0 0.0
      %339 = vmatpush1.msra.mxu0 0.0
      %340 = vmatprep.subr.mxu0 0.0
      %341 = vmatpush1.msra.mxu0 0.0
      %342 = vmatprep.subr.mxu0 0.0
      %343 = vmatpush1.msra.mxu0 0.0
      %344 = vmatprep.subr.mxu0 0.0
      %345 = vmatpush1.msra.mxu0 0.0
      %346 = vmatprep.subr.mxu0 0.0
      %347 = vmatpush1.msra.mxu0 0.0
      %348 = vmatprep.subr.mxu0 0.0
      %349 = vmatpush1.msra.mxu0 0.0
      %350 = vmatprep.subr.mxu0 0.0
      %351 = vmatpush1.msra.mxu0 0.0
      %352 = vmatprep.subr.mxu0 0.0
      %353 = vmatpush1.msra.mxu0 0.0
      %354 = vmatprep.subr.mxu0 0.0
      %355 = vmatpush1.msra.mxu0 0.0
      %356 = vmatprep.subr.mxu0 0.0
      %357 = vmatpush1.msra.mxu0 0.0
      %358 = vmatprep.subr.mxu0 0.0
      %359 = vmatpush1.msra.mxu0 0.0
      %360 = vmatprep.subr.mxu0 0.0
      %361 = vmatpush1.msra.mxu0 0.0
      %362 = vmatprep.subr.mxu0 0.0
      %363 = vmatpush1.msra.mxu0 0.0
      %364 = vmatprep.subr.mxu0 0.0
      %365 = vmatpush1.msra.mxu0 0.0
      %366 = vmatprep.subr.mxu0 0.0
      %367 = vmatpush1.msra.mxu0 0.0
      %368 = vmatprep.subr.mxu0 0.0
      %369 = vmatpush1.msra.mxu0 0.0
      %370 = vmatprep.subr.mxu0 0.0
      %371 = vmatpush1.msra.mxu0 0.0
      %372 = vmatprep.subr.mxu0 0.0
      %373 = vmatpush1.msra.mxu0 0.0
      %374 = vmatprep.subr.mxu0 0.0
      %375 = vmatpush1.msra.mxu0 0.0
      %376 = vmatprep.subr.mxu0 0.0
      %377 = vmatpush1.msra.mxu0 0.0
      %378 = vmatprep.subr.mxu0 0.0
      %379 = vmatpush1.msra.mxu0 0.0
      %380 = vmatprep.subr.mxu0 0.0
      %381 = vmatpush1.msra.mxu0 0.0
      %382 = vmatprep.subr.mxu0 0.0
      %383 = vmatpush1.msra.mxu0 0.0
      %384 = vmatprep.mubr.f32.mxu0 0.0
      %385 = vmatmul.mubr.f32.gmra.mrb[0].mxu0 %v269
      %v386 = vpop.f32.mrb[0].mxu0
      %v387 = vadd.f32 0.0, %v386
      %v388 = vpop.f32.mrb[0].mxu0
      %389 = vmatprep.mubr.f32.mxu0 0.0
      %390 = vmatmul.mubr.f32.gmra.mrb[0].mxu0 %v272
      %v391 = vpop.f32.mrb[0].mxu0
      %v392 = vadd.f32 0.0, %v391
      %v393 = vpop.f32.mrb[0].mxu0
      %394 = vmatprep.mubr.f32.mxu0 0.0
      %395 = vmatmul.mubr.f32.gmra.mrb[0].mxu0 %v275
      %v396 = vpop.f32.mrb[0].mxu0
      %v397 = vadd.f32 0.0, %v396
      %v398 = vpop.f32.mrb[0].mxu0
      %399 = vmatprep.mubr.f32.mxu0 0.0
      %400 = vmatmul.mubr.f32.gmra.mrb[0].mxu0 %v278
      %v401 = vpop.f32.mrb[0].mxu0
      %v402 = vadd.f32 0.0, %v401
      %v403 = vpop.f32.mrb[0].mxu0
      %404 = vmatprep.mubr.f32.mxu0 0.0
      %405 = vmatmul.mubr.f32.gmra.mrb[0].mxu0 %v281
      %v406 = vpop.f32.mrb[0].mxu0
      %v407 = vadd.f32 0.0, %v406
      %v408 = vpop.f32.mrb[0].mxu0
      %409 = vmatprep.mubr.f32.mxu0 0.0
      %410 = vmatmul.mubr.f32.gmra.mrb[0].mxu0 %v284
      %v411 = vpop.f32.mrb[0].mxu0
      %v412 = vadd.f32 0.0, %v411
      %v413 = vpop.f32.mrb[0].mxu0
      %414 = vmatprep.mubr.f32.mxu0 0.0
      %415 = vmatmul.mubr.f32.gmra.mrb[0].mxu0 %v287
      %v416 = vpop.f32.mrb[0].mxu0
      %v417 = vadd.f32 0.0, %v416
      %v418 = vpop.f32.mrb[0].mxu0
      %419 = vmatprep.mubr.f32.mxu0 0.0
      %420 = vmatmul.mubr.f32.gmra.mrb[0].mxu0 %v290
      %v421 = vpop.f32.mrb[0].mxu0
      %v422 = vadd.f32 0.0, %v421
      %v423 = vpop.f32.mrb[0].mxu0
      %424 = vmatprep.mubr.f32.mxu0 0.0
      %425 = vmatmul.mubr.f32.gmra.mrb[0].mxu0 %v293
      %v426 = vpop.f32.mrb[0].mxu0
      %v427 = vadd.f32 0.0, %v426
      %v428 = vpop.f32.mrb[0].mxu0
      %429 = vmatprep.mubr.f32.mxu0 0.0
      %430 = vmatmul.mubr.f32.gmra.mrb[0].mxu0 %v296
      %v431 = vpop.f32.mrb[0].mxu0
      %v432 = vadd.f32 0.0, %v431
      %v433 = vpop.f32.mrb[0].mxu0
      %434 = vmatprep.mubr.f32.mxu0 0.0
      %435 = vmatmul.mubr.f32.gmra.mrb[0].mxu0 %v299
      %v436 = vpop.f32.mrb[0].mxu0
      %v437 = vadd.f32 0.0, %v436
      %v438 = vpop.f32.mrb[0].mxu0
      %439 = vmatprep.mubr.f32.mxu0 0.0
      %440 = vmatmul.mubr.f32.gmra.mrb[0].mxu0 %v302
      %v441 = vpop.f32.mrb[0].mxu0
      %v442 = vadd.f32 0.0, %v441
      %v443 = vpop.f32.mrb[0].mxu0
      %444 = vmatprep.mubr.f32.mxu0 0.0
      %445 = vmatmul.mubr.f32.gmra.mrb[0].mxu0 %v305
      %v446 = vpop.f32.mrb[0].mxu0
      %v447 = vadd.f32 0.0, %v446
      %v448 = vpop.f32.mrb[0].mxu0
      %449 = vmatprep.mubr.f32.mxu0 0.0
      %450 = vmatmul.mubr.f32.gmra.mrb[0].mxu0 %v308
      %v451 = vpop.f32.mrb[0].mxu0
      %v452 = vadd.f32 0.0, %v451
      %v453 = vpop.f32.mrb[0].mxu0
      %454 = vmatprep.mubr.f32.mxu0 0.0
      %455 = vmatmul.mubr.f32.gmra.mrb[0].mxu0 %v311
      %v456 = vpop.f32.mrb[0].mxu0
      %v457 = vadd.f32 0.0, %v456
      %v458 = vpop.f32.mrb[0].mxu0
      %459 = vmatprep.mubr.f32.mxu0 0.0
      %460 = vmatmul.mubr.f32.gmra.mrb[0].mxu0 %v314
      %v461 = vpop.f32.mrb[0].mxu0
      %v462 = vadd.f32 0.0, %v461
      %v463 = vpop.f32.mrb[0].mxu0
      %464 = vdwg.mxu0
      %v465 = vld [vmem:[%s242] sm:$0xff]
      %v466 = vld [vmem:[%s242 + $0x8] sm:$0xff]
      %v467 = vld [vmem:[%s242 + $0x10] sm:$0xff]
      %v468 = vld [vmem:[%s242 + $0x18] sm:$0xff]
      %v469 = vld [vmem:[%s242 + $0x20] sm:$0xff]
      %v470 = vld [vmem:[%s242 + $0x28] sm:$0xff]
      %v471 = vld [vmem:[%s242 + $0x30] sm:$0xff]
      %v472 = vld [vmem:[%s242 + $0x38] sm:$0xff]
      %v473 = vld [vmem:[%s242 + $0x40] sm:$0xff]
      %v474 = vld [vmem:[%s242 + $0x48] sm:$0xff]
      %v475 = vld [vmem:[%s242 + $0x50] sm:$0xff]
      %v476 = vld [vmem:[%s242 + $0x58] sm:$0xff]
      %v477 = vld [vmem:[%s242 + $0x60] sm:$0xff]
      %v478 = vld [vmem:[%s242 + $0x68] sm:$0xff]
      %v479 = vld [vmem:[%s242 + $0x70] sm:$0xff]
      %v480 = vld [vmem:[%s242 + $0x78] sm:$0xff]
      %v481 = vld [vmem:[%s3] sm:$0x1]
      %482 = vset.pattern.permute.xlu0 0
      %483 = vperm.xlu0 %482, %v465
      %v484 = vpop.permute.xlu0 %483
      %485 = vset.pattern.permute.xlu0 0
      %486 = vperm.xlu0 %485, %v466
      %v487 = vpop.permute.xlu0 %486
      %488 = vset.pattern.permute.xlu0 0
      %489 = vperm.xlu0 %488, %v467
      %v490 = vpop.permute.xlu0 %489
      %491 = vset.pattern.permute.xlu0 0
      %492 = vperm.xlu0 %491, %v468
      %v493 = vpop.permute.xlu0 %492
      %494 = vset.pattern.permute.xlu0 0
      %495 = vperm.xlu0 %494, %v469
      %v496 = vpop.permute.xlu0 %495
      %497 = vset.pattern.permute.xlu0 0
      %498 = vperm.xlu0 %497, %v470
      %v499 = vpop.permute.xlu0 %498
      %500 = vset.pattern.permute.xlu0 0
      %501 = vperm.xlu0 %500, %v471
      %v502 = vpop.permute.xlu0 %501
      %503 = vset.pattern.permute.xlu0 0
      %504 = vperm.xlu0 %503, %v472
      %v505 = vpop.permute.xlu0 %504
      %506 = vset.pattern.permute.xlu0 0
      %507 = vperm.xlu0 %506, %v473
      %v508 = vpop.permute.xlu0 %507
      %509 = vset.pattern.permute.xlu0 0
      %510 = vperm.xlu0 %509, %v474
      %v511 = vpop.permute.xlu0 %510
      %512 = vset.pattern.permute.xlu0 0
      %513 = vperm.xlu0 %512, %v475
      %v514 = vpop.permute.xlu0 %513
      %515 = vset.pattern.permute.xlu0 0
      %516 = vperm.xlu0 %515, %v476
      %v517 = vpop.permute.xlu0 %516
      %518 = vset.pattern.permute.xlu0 0
      %519 = vperm.xlu0 %518, %v477
      %v520 = vpop.permute.xlu0 %519
      %521 = vset.pattern.permute.xlu0 0
      %522 = vperm.xlu0 %521, %v478
      %v523 = vpop.permute.xlu0 %522
      %524 = vset.pattern.permute.xlu0 0
      %525 = vperm.xlu0 %524, %v479
      %v526 = vpop.permute.xlu0 %525
      %527 = vset.pattern.permute.xlu0 0
      %528 = vperm.xlu0 %527, %v480
      %v529 = vpop.permute.xlu0 %528
      %v530 = vlaneseq
      %v531 = vshrl.u32 %v530, 7
      %v532 = vsub.s32 0, %v531
      %v533 = vrot.slane %v481, %v532
      %vm534 = vcmp.eq.s32.totalorder %v484, %v533
      %vm535 = vcmp.eq.s32.totalorder %v487, %v533
      %vm536 = vcmp.eq.s32.totalorder %v490, %v533
      %vm537 = vcmp.eq.s32.totalorder %v493, %v533
      %vm538 = vcmp.eq.s32.totalorder %v496, %v533
      %vm539 = vcmp.eq.s32.totalorder %v499, %v533
      %vm540 = vcmp.eq.s32.totalorder %v502, %v533
      %vm541 = vcmp.eq.s32.totalorder %v505, %v533
      %vm542 = vcmp.eq.s32.totalorder %v508, %v533
      %vm543 = vcmp.eq.s32.totalorder %v511, %v533
      %vm544 = vcmp.eq.s32.totalorder %v514, %v533
      %vm545 = vcmp.eq.s32.totalorder %v517, %v533
      %vm546 = vcmp.eq.s32.totalorder %v520, %v533
      %vm547 = vcmp.eq.s32.totalorder %v523, %v533
      %vm548 = vcmp.eq.s32.totalorder %v526, %v533
      %vm549 = vcmp.eq.s32.totalorder %v529, %v533
      %v550 = vsel %vm534, %v387, 0.0
      %v551 = vsel %vm535, %v392, 0.0
      %v552 = vsel %vm536, %v397, 0.0
      %v553 = vsel %vm537, %v402, 0.0
      %v554 = vsel %vm538, %v407, 0.0
      %v555 = vsel %vm539, %v412, 0.0
      %v556 = vsel %vm540, %v417, 0.0
      %v557 = vsel %vm541, %v422, 0.0
      %v558 = vsel %vm542, %v427, 0.0
      %v559 = vsel %vm543, %v432, 0.0
      %v560 = vsel %vm544, %v437, 0.0
      %v561 = vsel %vm545, %v442, 0.0
      %v562 = vsel %vm546, %v447, 0.0
      %v563 = vsel %vm547, %v452, 0.0
      %v564 = vsel %vm548, %v457, 0.0
      %v565 = vsel %vm549, %v462, 0.0
      %v566 = vld [vmem:[%s4] sm:$0xff]
      %vm567 = vcmask 64512
      %v569 = vsel %vm567, %v550, 0
      %v572 = vsel %vm567, %v551, 0
      %v575 = vsel %vm567, %v552, 0
      %v578 = vsel %vm567, %v553, 0
      %v581 = vsel %vm567, %v554, 0
      %v584 = vsel %vm567, %v555, 0
      %v587 = vsel %vm567, %v556, 0
      %v590 = vsel %vm567, %v557, 0
      %v593 = vsel %vm567, %v558, 0
      %v596 = vsel %vm567, %v559, 0
      %v599 = vsel %vm567, %v560, 0
      %v602 = vsel %vm567, %v561, 0
      %v605 = vsel %vm567, %v562, 0
      %v608 = vsel %vm567, %v563, 0
      %v611 = vsel %vm567, %v564, 0
      %v614 = vsel %vm567, %v565, 0
      %616 = vmatprep.subr.mxu0 0.0
      %617 = vmatpush1.msra.mxu0 %v566
      %618 = vmatprep.subr.mxu0 0.0
      %619 = vmatpush1.msra.mxu0 0.0
      %620 = vmatprep.subr.mxu0 0.0
      %621 = vmatpush1.msra.mxu0 0.0
      %622 = vmatprep.subr.mxu0 0.0
      %623 = vmatpush1.msra.mxu0 0.0
      %624 = vmatprep.subr.mxu0 0.0
      %625 = vmatpush1.msra.mxu0 0.0
      %626 = vmatprep.subr.mxu0 0.0
      %627 = vmatpush1.msra.mxu0 0.0
      %628 = vmatprep.subr.mxu0 0.0
      %629 = vmatpush1.msra.mxu0 0.0
      %630 = vmatprep.subr.mxu0 0.0
      %631 = vmatpush1.msra.mxu0 0.0
      %632 = vmatprep.subr.mxu0 0.0
      %633 = vmatpush1.msra.mxu0 0.0
      %634 = vmatprep.subr.mxu0 0.0
      %635 = vmatpush1.msra.mxu0 0.0
      %636 = vmatprep.subr.mxu0 0.0
      %637 = vmatpush1.msra.mxu0 0.0
      %638 = vmatprep.subr.mxu0 0.0
      %639 = vmatpush1.msra.mxu0 0.0
      %640 = vmatprep.subr.mxu0 0.0
      %641 = vmatpush1.msra.mxu0 0.0
      %642 = vmatprep.subr.mxu0 0.0
      %643 = vmatpush1.msra.mxu0 0.0
      %644 = vmatprep.subr.mxu0 0.0
      %645 = vmatpush1.msra.mxu0 0.0
      %646 = vmatprep.subr.mxu0 0.0
      %647 = vmatpush1.msra.mxu0 0.0
      %648 = vmatprep.subr.mxu0 0.0
      %649 = vmatpush1.msra.mxu0 0.0
      %650 = vmatprep.subr.mxu0 0.0
      %651 = vmatpush1.msra.mxu0 0.0
      %652 = vmatprep.subr.mxu0 0.0
      %653 = vmatpush1.msra.mxu0 0.0
      %654 = vmatprep.subr.mxu0 0.0
      %655 = vmatpush1.msra.mxu0 0.0
      %656 = vmatprep.subr.mxu0 0.0
      %657 = vmatpush1.msra.mxu0 0.0
      %658 = vmatprep.subr.mxu0 0.0
      %659 = vmatpush1.msra.mxu0 0.0
      %660 = vmatprep.subr.mxu0 0.0
      %661 = vmatpush1.msra.mxu0 0.0
      %662 = vmatprep.subr.mxu0 0.0
      %663 = vmatpush1.msra.mxu0 0.0
      %664 = vmatprep.subr.mxu0 0.0
      %665 = vmatpush1.msra.mxu0 0.0
      %666 = vmatprep.subr.mxu0 0.0
      %667 = vmatpush1.msra.mxu0 0.0
      %668 = vmatprep.subr.mxu0 0.0
      %669 = vmatpush1.msra.mxu0 0.0
      %670 = vmatprep.subr.mxu0 0.0
      %671 = vmatpush1.msra.mxu0 0.0
      %672 = vmatprep.subr.mxu0 0.0
      %673 = vmatpush1.msra.mxu0 0.0
      %674 = vmatprep.subr.mxu0 0.0
      %675 = vmatpush1.msra.mxu0 0.0
      %676 = vmatprep.subr.mxu0 0.0
      %677 = vmatpush1.msra.mxu0 0.0
      %678 = vmatprep.subr.mxu0 0.0
      %679 = vmatpush1.msra.mxu0 0.0
      %680 = vmatprep.mubr.f32.mxu0 0.0
      %681 = vmatmul.mubr.f32.gmra.mrb[0].mxu0 %v569
      %v682 = vpop.f32.mrb[0].mxu0
      %v683 = vadd.f32 0.0, %v682
      %v684 = vpop.f32.mrb[0].mxu0
      %685 = vmatprep.mubr.f32.mxu0 0.0
      %686 = vmatmul.mubr.f32.gmra.mrb[0].mxu0 %v572
      %v687 = vpop.f32.mrb[0].mxu0
      %v688 = vadd.f32 0.0, %v687
      %v689 = vpop.f32.mrb[0].mxu0
      %690 = vmatprep.mubr.f32.mxu0 0.0
      %691 = vmatmul.mubr.f32.gmra.mrb[0].mxu0 %v575
      %v692 = vpop.f32.mrb[0].mxu0
      %v693 = vadd.f32 0.0, %v692
      %v694 = vpop.f32.mrb[0].mxu0
      %695 = vmatprep.mubr.f32.mxu0 0.0
      %696 = vmatmul.mubr.f32.gmra.mrb[0].mxu0 %v578
      %v697 = vpop.f32.mrb[0].mxu0
      %v698 = vadd.f32 0.0, %v697
      %v699 = vpop.f32.mrb[0].mxu0
      %700 = vmatprep.mubr.f32.mxu0 0.0
      %701 = vmatmul.mubr.f32.gmra.mrb[0].mxu0 %v581
      %v702 = vpop.f32.mrb[0].mxu0
      %v703 = vadd.f32 0.0, %v702
      %v704 = vpop.f32.mrb[0].mxu0
      %705 = vmatprep.mubr.f32.mxu0 0.0
      %706 = vmatmul.mubr.f32.gmra.mrb[0].mxu0 %v584
      %v707 = vpop.f32.mrb[0].mxu0
      %v708 = vadd.f32 0.0, %v707
      %v709 = vpop.f32.mrb[0].mxu0
      %710 = vmatprep.mubr.f32.mxu0 0.0
      %711 = vmatmul.mubr.f32.gmra.mrb[0].mxu0 %v587
      %v712 = vpop.f32.mrb[0].mxu0
      %v713 = vadd.f32 0.0, %v712
      %v714 = vpop.f32.mrb[0].mxu0
      %715 = vmatprep.mubr.f32.mxu0 0.0
      %716 = vmatmul.mubr.f32.gmra.mrb[0].mxu0 %v590
      %v717 = vpop.f32.mrb[0].mxu0
      %v718 = vadd.f32 0.0, %v717
      %v719 = vpop.f32.mrb[0].mxu0
      %720 = vmatprep.mubr.f32.mxu0 0.0
      %721 = vmatmul.mubr.f32.gmra.mrb[0].mxu0 %v593
      %v722 = vpop.f32.mrb[0].mxu0
      %v723 = vadd.f32 0.0, %v722
      %v724 = vpop.f32.mrb[0].mxu0
      %725 = vmatprep.mubr.f32.mxu0 0.0
      %726 = vmatmul.mubr.f32.gmra.mrb[0].mxu0 %v596
      %v727 = vpop.f32.mrb[0].mxu0
      %v728 = vadd.f32 0.0, %v727
      %v729 = vpop.f32.mrb[0].mxu0
      %730 = vmatprep.mubr.f32.mxu0 0.0
      %731 = vmatmul.mubr.f32.gmra.mrb[0].mxu0 %v599
      %v732 = vpop.f32.mrb[0].mxu0
      %v733 = vadd.f32 0.0, %v732
      %v734 = vpop.f32.mrb[0].mxu0
      %735 = vmatprep.mubr.f32.mxu0 0.0
      %736 = vmatmul.mubr.f32.gmra.mrb[0].mxu0 %v602
      %v737 = vpop.f32.mrb[0].mxu0
      %v738 = vadd.f32 0.0, %v737
      %v739 = vpop.f32.mrb[0].mxu0
      %740 = vmatprep.mubr.f32.mxu0 0.0
      %741 = vmatmul.mubr.f32.gmra.mrb[0].mxu0 %v605
      %v742 = vpop.f32.mrb[0].mxu0
      %v743 = vadd.f32 0.0, %v742
      %v744 = vpop.f32.mrb[0].mxu0
      %745 = vmatprep.mubr.f32.mxu0 0.0
      %746 = vmatmul.mubr.f32.gmra.mrb[0].mxu0 %v608
      %v747 = vpop.f32.mrb[0].mxu0
      %v748 = vadd.f32 0.0, %v747
      %v749 = vpop.f32.mrb[0].mxu0
      %750 = vmatprep.mubr.f32.mxu0 0.0
      %751 = vmatmul.mubr.f32.gmra.mrb[0].mxu0 %v611
      %v752 = vpop.f32.mrb[0].mxu0
      %v753 = vadd.f32 0.0, %v752
      %v754 = vpop.f32.mrb[0].mxu0
      %755 = vmatprep.mubr.f32.mxu0 0.0
      %756 = vmatmul.mubr.f32.gmra.mrb[0].mxu0 %v614
      %v757 = vpop.f32.mrb[0].mxu0
      %v758 = vadd.f32 0.0, %v757
      %v759 = vpop.f32.mrb[0].mxu0
      %760 = vdwg.mxu0
      %vm761 = vcmp.ge.f32.partialorder %v683, 0.0
      %vm762 = vcmp.ge.f32.partialorder %v688, 0.0
      %vm763 = vcmp.ge.f32.partialorder %v693, 0.0
      %vm764 = vcmp.ge.f32.partialorder %v698, 0.0
      %vm765 = vcmp.ge.f32.partialorder %v703, 0.0
      %vm766 = vcmp.ge.f32.partialorder %v708, 0.0
      %vm767 = vcmp.ge.f32.partialorder %v713, 0.0
      %vm768 = vcmp.ge.f32.partialorder %v718, 0.0
      %vm769 = vcmp.ge.f32.partialorder %v723, 0.0
      %vm770 = vcmp.ge.f32.partialorder %v728, 0.0
      %vm771 = vcmp.ge.f32.partialorder %v733, 0.0
      %vm772 = vcmp.ge.f32.partialorder %v738, 0.0
      %vm773 = vcmp.ge.f32.partialorder %v743, 0.0
      %vm774 = vcmp.ge.f32.partialorder %v748, 0.0
      %vm775 = vcmp.ge.f32.partialorder %v753, 0.0
      %vm776 = vcmp.ge.f32.partialorder %v758, 0.0
      %v777 = vmul.f32 %v683, 0.01
      %v778 = vmul.f32 %v688, 0.01
      %v779 = vmul.f32 %v693, 0.01
      %v780 = vmul.f32 %v698, 0.01
      %v781 = vmul.f32 %v703, 0.01
      %v782 = vmul.f32 %v708, 0.01
      %v783 = vmul.f32 %v713, 0.01
      %v784 = vmul.f32 %v718, 0.01
      %v785 = vmul.f32 %v723, 0.01
      %v786 = vmul.f32 %v728, 0.01
      %v787 = vmul.f32 %v733, 0.01
      %v788 = vmul.f32 %v738, 0.01
      %v789 = vmul.f32 %v743, 0.01
      %v790 = vmul.f32 %v748, 0.01
      %v791 = vmul.f32 %v753, 0.01
      %v792 = vmul.f32 %v758, 0.01
      %v793 = vsel %vm761, %v683, %v777
      %v794 = vsel %vm762, %v688, %v778
      %v795 = vsel %vm763, %v693, %v779
      %v796 = vsel %vm764, %v698, %v780
      %v797 = vsel %vm765, %v703, %v781
      %v798 = vsel %vm766, %v708, %v782
      %v799 = vsel %vm767, %v713, %v783
      %v800 = vsel %vm768, %v718, %v784
      %v801 = vsel %vm769, %v723, %v785
      %v802 = vsel %vm770, %v728, %v786
      %v803 = vsel %vm771, %v733, %v787
      %v804 = vsel %vm772, %v738, %v788
      %v805 = vsel %vm773, %v743, %v789
      %v806 = vsel %vm774, %v748, %v790
      %v807 = vsel %vm775, %v753, %v791
      %v808 = vsel %vm776, %v758, %v792
      %vm809 = vcmask 261120
      %810 = vst.msk [vmem:[%s248] sm:$0xff] %vm809, %v793
      %811 = vst.msk [vmem:[%s248 + $0x8] sm:$0xff] %vm809, %v794
      %812 = vst.msk [vmem:[%s248 + $0x10] sm:$0xff] %vm809, %v795
      %813 = vst.msk [vmem:[%s248 + $0x18] sm:$0xff] %vm809, %v796
      %814 = vst.msk [vmem:[%s248 + $0x20] sm:$0xff] %vm809, %v797
      %815 = vst.msk [vmem:[%s248 + $0x28] sm:$0xff] %vm809, %v798
      %816 = vst.msk [vmem:[%s248 + $0x30] sm:$0xff] %vm809, %v799
      %817 = vst.msk [vmem:[%s248 + $0x38] sm:$0xff] %vm809, %v800
      %818 = vst.msk [vmem:[%s248 + $0x40] sm:$0xff] %vm809, %v801
      %819 = vst.msk [vmem:[%s248 + $0x48] sm:$0xff] %vm809, %v802
      %820 = vst.msk [vmem:[%s248 + $0x50] sm:$0xff] %vm809, %v803
      %821 = vst.msk [vmem:[%s248 + $0x58] sm:$0xff] %vm809, %v804
      %822 = vst.msk [vmem:[%s248 + $0x60] sm:$0xff] %vm809, %v805
      %823 = vst.msk [vmem:[%s248 + $0x68] sm:$0xff] %vm809, %v806
      %824 = vst.msk [vmem:[%s248 + $0x70] sm:$0xff] %vm809, %v807
      %825 = vst.msk [vmem:[%s248 + $0x78] sm:$0xff] %vm809, %v808
      %s826 = smul.u32 16, %s16
      %p827 = scmp.lt.s32.totalorder %s826, 31
      %s828 = scalar_select %p827, %s826, 31
      %s829 = smul.addr %s828, 8
      %s830 = scalar_lea.vmem %s5, %s829
      // Predicated region
      $region41: #{diffusion_layer_spectral.3} parent=39 // pred_check
        %p831 = pneg %p149
      $region42: #{diffusion_layer_spectral.3} parent=39 // pred_check_branch
        %833 = sbr.rel (%p831) target = $region44
      $region43: #{diffusion_layer_spectral.3} parent=39 // pred_region
        %s834 = smul.u32 16, %s16
      $region44: #{diffusion_layer_spectral.3} parent=39 // pred_fallthru
        _
    $region40: #{diffusion_layer_spectral.3} parent=5 // pred_fallthru
      _
    %p835 = scmp.le.s32.totalorder 2, %s11
    // Predicated region
    $region45: #{diffusion_layer_spectral.3} parent=5 // pred_check
      %p836 = pneg %p835
    $region46: #{diffusion_layer_spectral.3} parent=5 // pred_check_branch
      %838 = sbr.rel (%p836) target = $region48
    $region47: #{diffusion_layer_spectral.3} parent=5 // pred_region
      %s839 = ssub.s32 %s11, 2
      // Predicated region
      $region49: #{diffusion_layer_spectral.3} parent=47 // pred_check
        %p840 = pneg %p155
      $region50: #{diffusion_layer_spectral.3} parent=47 // pred_check_branch
        %842 = sbr.rel (%p840) target = $region52
      $region51: #{diffusion_layer_spectral.3} parent=47 // pred_region
        %s843 = smul.u32 16, %s17
        %p844 = scmp.lt.s32.totalorder %s843, 31
        %s845 = scalar_select %p844, %s843, 31
        %s846 = smul.addr %s845, 8
        %s847 = scalar_lea.vmem %s5, %s846
      $region52: #{diffusion_layer_spectral.3} parent=47 // pred_fallthru
        _
    $region48: #{diffusion_layer_spectral.3} parent=5 // pred_fallthru
      _
  $region6: #{diffusion_layer_spectral.3} parent=0 // loop_footer
    %s15 = sadd.s32 1, %s11
  $region7: #{diffusion_layer_spectral.3} parent=0 // loop_footer_branch
    %10 = sbr.rel target = $region3
  $region8: #{diffusion_layer_spectral.3} parent=0 // loop_exit
    _

</llo_original>
